<compile_context>
chip_gen: v7x
topology: tpu7x:2x2x1
jax: 0.10.0
libtpu: 0.0.40
codegen_flags: <defaults>
</compile_context>

<pallas_src>
import jax
import jax.numpy as jnp
from jax import lax
from jax.experimental import pallas as pl
from jax.experimental.pallas import tpu as pltpu

_SQRT1_2 = 0.7071067811865476
_PREC = jax.lax.Precision.HIGHEST   # reference only


def _gelu(x):
    # exact (erf) GELU == torch.nn.GELU default
    return 0.5 * x * (1.0 + lax.erf(x * _SQRT1_2))


def mbconv2_kernel(x_ref,
                   w_da_ref, b_da_ref,              # fused [downsample | conv_a(+BN folded)]
                   wb_ref, bb_ref,                  # conv_b 3x3 (BN folded), (9*mid, mid)
                   w1_ref, b1_ref, w2_ref, b2_ref,  # squeeze-excitation
                   wc_ref, bc_ref,                  # conv_c 1x1 (+bias), lane-padded
                   o_ref,
                   pad_ref):                        # VMEM scratch: zero-padded feature map
    Nb, H, W, Cin = x_ref.shape
    mid = pad_ref.shape[-1]
    Cp = o_ref.shape[-1]                            # lane-padded output width (128)
    M = Nb * H * W
    bf16 = jnp.bfloat16

    x = x_ref[...].reshape(M, Cin).astype(jnp.float32)

    # ---- fused matmul: [downsample 1x1 | pre_norm+conv_a+BN folded], one MXU pass ----
    y = jnp.dot(x.astype(bf16), w_da_ref[...],
                preferred_element_type=jnp.float32) + b_da_ref[...]
    ds = y[:, :Cp]                                  # residual branch (lane-padded)
    h = _gelu(y[:, Cp:])                            # conv_a output, (M, mid), f32

    # ---- conv_b: 3x3 conv, stride 1, pad 1 (BN folded) -> GELU ----
    # Zero only the 1-pixel border (interior fully overwritten), then build an
    # im2col tile (M, 9*mid) from the 9 shifted views and do ONE K=9*mid matmul.
    zrow = jnp.zeros((Nb, 1, W + 2, mid), jnp.float32)
    zcol = jnp.zeros((Nb, H, 1, mid), jnp.float32)
    pad_ref[:, 0:1, :, :] = zrow
    pad_ref[:, H + 1:H + 2, :, :] = zrow
    pad_ref[:, 1:H + 1, 0:1, :] = zcol
    pad_ref[:, 1:H + 1, W + 1:W + 2, :] = zcol
    pad_ref[:, 1:H + 1, 1:W + 1, :] = h.reshape(Nb, H, W, mid)

    taps = []
    for dy in range(3):
        for dx in range(3):
            taps.append(
                pad_ref[:, dy:dy + H, dx:dx + W, :].reshape(M, mid).astype(bf16))
    im2col = jnp.concatenate(taps, axis=-1)                      # (M, 9*mid) bf16
    h = jnp.dot(im2col, wb_ref[...],
                preferred_element_type=jnp.float32) + bb_ref[...]
    h = _gelu(h)                                                 # (M, mid) f32

    # ---- squeeze-excitation (per-image): avgpool -> 1x1 -> SiLU -> 1x1 -> Sigmoid ----
    h3 = h.reshape(Nb, H * W, mid)
    pooled = jnp.mean(h3, axis=1)                                # (Nb, mid)
    s = jnp.dot(pooled.astype(bf16), w1_ref[...],
                preferred_element_type=jnp.float32) + b1_ref[...]   # (Nb, sqz)
    s = s * jax.nn.sigmoid(s)                                    # SiLU
    s = jnp.dot(s.astype(bf16), w2_ref[...],
                preferred_element_type=jnp.float32) + b2_ref[...]   # (Nb, mid)
    gate = jax.nn.sigmoid(s)
    h = (h3 * gate[:, None, :]).reshape(M, mid)

    # ---- conv_c: 1x1 conv + bias (lane-padded), then residual add ----
    out = jnp.dot(h.astype(bf16), wc_ref[...],
                  preferred_element_type=jnp.float32) + bc_ref[...] + ds
    o_ref[...] = out.reshape(Nb, H, W, Cp).astype(o_ref.dtype)


def fold_params(p, lane_pad=128):
    """One-time constant folding: BN into conv weights, wd|wa fusion, lane padding,
    bf16 weight casts. Call once; pass the result to mbconv2_pallas."""
    Cin, mid = p['wa'].shape
    Cout = p['wc'].shape[1]
    Cp = max(lane_pad, Cout)
    f32, bf16 = jnp.float32, jnp.bfloat16

    # conv_a with pre_norm and its own BN folded:
    #   gelu(((x*pn_s + pn_b) @ wa) * na_s + na_b)
    # = gelu(x @ (pn_s^T * wa * na_s) + ((pn_b @ wa) * na_s + na_b))
    wa_f = (p['pn_s'].reshape(Cin, 1) * p['wa']) * p['na_s']          # (Cin, mid)
    ba_f = (p['pn_b'] @ p['wa']) * p['na_s'] + p['na_b']              # (1, mid)

    # downsample 1x1, zero-padded to Cp output lanes
    wd_p = jnp.zeros((Cin, Cp), f32).at[:, :Cout].set(p['wd'])
    bd_p = jnp.zeros((1, Cp), f32).at[:, :Cout].set(p['bd'])

    w_da = jnp.concatenate([wd_p, wa_f], axis=1)                      # (Cin, Cp+mid)
    b_da = jnp.concatenate([bd_p, ba_f], axis=1)                      # (1, Cp+mid)

    # conv_b 3x3 with BN folded into output channels, flattened for the im2col matmul
    wb_f = (p['wb'] * p['nb_s'].reshape(1, 1, 1, mid)).reshape(9 * mid, mid)
    bb_f = p['nb_b']                                                  # (1, mid)

    # conv_c, zero-padded to Cp output lanes
    wc_p = jnp.zeros((mid, Cp), f32).at[:, :Cout].set(p['wc'])
    bc_p = jnp.zeros((1, Cp), f32).at[:, :Cout].set(p['bc'])

    return dict(
        w_da=w_da.astype(bf16), b_da=b_da,
        wb=wb_f.astype(bf16), bb=bb_f,
        w1=p['w1'].astype(bf16), b1=p['b1'],
        w2=p['w2'].astype(bf16), b2=p['b2'],
        wc=wc_p.astype(bf16), bc=bc_p,
        meta=dict(Cout=Cout, Cp=Cp, mid=mid),
    )


def mbconv2_pallas(x_nchw, fp, n_blk=2):
    N, Cin, H, W = x_nchw.shape
    meta = fp['meta']
    mid, Cp, Cout = meta['mid'], meta['Cp'], meta['Cout']
    assert N % n_blk == 0, "batch must be divisible by n_blk"
    x_nhwc = jnp.transpose(x_nchw, (0, 2, 3, 1))

    order = ['w_da', 'b_da', 'wb', 'bb', 'w1', 'b1', 'w2', 'b2', 'wc', 'bc']
    params = [fp[k] for k in order]

    def full_spec(a):
        nd = a.ndim
        return pl.BlockSpec(a.shape, lambda n, _nd=nd: (0,) * _nd)

    out_nhwc = pl.pallas_call(
        mbconv2_kernel,
        out_shape=jax.ShapeDtypeStruct((N, H, W, Cp), x_nchw.dtype),
        grid=(N // n_blk,),
        in_specs=[pl.BlockSpec((n_blk, H, W, Cin), lambda n: (n, 0, 0, 0))]
                 + [full_spec(a) for a in params],
        out_specs=pl.BlockSpec((n_blk, H, W, Cp), lambda n: (n, 0, 0, 0)),
        scratch_shapes=[pltpu.VMEM((n_blk, H + 2, W + 2, mid), jnp.float32)],
        compiler_params=pltpu.CompilerParams(dimension_semantics=("parallel",)),
    )(x_nhwc, *params)
    out = out_nhwc[..., :Cout]
    return jnp.transpose(out, (0, 3, 1, 2))


# ---------------- deterministic parameter construction ----------------
def _folded_bn(key, C):
    k1, k2, k3, k4 = jax.random.split(key, 4)
    gamma = jax.random.uniform(k1, (C,), jnp.float32, 0.5, 1.5)
    beta = 0.1 * jax.random.normal(k2, (C,), jnp.float32)
    mean = 0.1 * jax.random.normal(k3, (C,), jnp.float32)
    var = jax.random.uniform(k4, (C,), jnp.float32, 0.5, 1.5)
    scale = gamma / jnp.sqrt(var + 1e-5)
    shift = beta - mean * scale
    return scale.reshape(1, C), shift.reshape(1, C)


def init_params(key, Cin, Cout, mid, sqz):
    ks = jax.random.split(key, 12)

    def conv_w(k, cout, cin, kh=1, kw=1):
        # PyTorch conv weight layout (Cout, Cin, kh, kw), ~Kaiming scale.
        fan_in = cin * kh * kw
        return jax.random.normal(k, (cout, cin, kh, kw), jnp.float32) / jnp.sqrt(fan_in)

    p = {}
    # downsample: Conv2d(Cin, Cout, 1) with bias
    wd_t = conv_w(ks[0], Cout, Cin)
    p['wd'] = wd_t[:, :, 0, 0].T                                   # (Cin, Cout)
    p['bd'] = (0.05 * jax.random.normal(ks[1], (Cout,), jnp.float32)).reshape(1, Cout)
    # pre_norm
    p['pn_s'], p['pn_b'] = _folded_bn(ks[2], Cin)
    # conv_a: Conv2d(Cin, mid, 1, bias=False) + BN
    p['wa'] = conv_w(ks[3], mid, Cin)[:, :, 0, 0].T                # (Cin, mid)
    p['na_s'], p['na_b'] = _folded_bn(ks[4], mid)
    # conv_b: Conv2d(mid, mid, 3, pad=1, bias=False) + BN  -> HWIO layout
    wb_t = conv_w(ks[5], mid, mid, 3, 3)                           # (Cout, Cin, 3, 3)
    p['wb'] = jnp.transpose(wb_t, (2, 3, 1, 0))                    # (3, 3, Cin, Cout)
    p['nb_s'], p['nb_b'] = _folded_bn(ks[6], mid)
    # squeeze-excitation: 1x1 convs with bias
    p['w1'] = conv_w(ks[7], sqz, mid)[:, :, 0, 0].T                # (mid, sqz)
    p['b1'] = (0.05 * jax.random.normal(ks[8], (sqz,), jnp.float32)).reshape(1, sqz)
    p['w2'] = conv_w(ks[9], mid, sqz)[:, :, 0, 0].T                # (sqz, mid)
    p['b2'] = (0.05 * jax.random.normal(ks[10], (mid,), jnp.float32)).reshape(1, mid)
    # conv_c: Conv2d(mid, Cout, 1) with bias
    kc1, kc2 = jax.random.split(ks[11])
    p['wc'] = conv_w(kc1, Cout, mid)[:, :, 0, 0].T                 # (mid, Cout)
    p['bc'] = (0.05 * jax.random.normal(kc2, (Cout,), jnp.float32)).reshape(1, Cout)
    return p


# ---------------- pure-JAX reference (for correctness check) ----------------
def mbconv2_ref(x_nchw, p):
    x = jnp.transpose(x_nchw, (0, 2, 3, 1)).astype(jnp.float32)
    ds = jnp.einsum('nhwc,cd->nhwd', x, p['wd'], precision=_PREC) + p['bd'][0]
    h = x * p['pn_s'][0] + p['pn_b'][0]
    h = jnp.einsum('nhwc,cd->nhwd', h, p['wa'], precision=_PREC)
    h = _gelu(h * p['na_s'][0] + p['na_b'][0])
    h = lax.conv_general_dilated(h, p['wb'], window_strides=(1, 1),
                                 padding=((1, 1), (1, 1)),
                                 dimension_numbers=('NHWC', 'HWIO', 'NHWC'),
                                 precision=_PREC)
    h = _gelu(h * p['nb_s'][0] + p['nb_b'][0])
    pooled = jnp.mean(h, axis=(1, 2), keepdims=True)
    s = jnp.einsum('nhwc,cd->nhwd', pooled, p['w1'], precision=_PREC) + p['b1'][0]
    s = s * jax.nn.sigmoid(s)
    s = jnp.einsum('nhwc,cd->nhwd', s, p['w2'], precision=_PREC) + p['b2'][0]
    h = h * jax.nn.sigmoid(s)
    out = jnp.einsum('nhwc,cd->nhwd', h, p['wc'], precision=_PREC) + p['bc'][0]
    out = out + ds
    return jnp.transpose(out, (0, 3, 1, 2))


if __name__ == "__main__":
    key = jax.random.PRNGKey(0)
    N, Cin, Cout, H, W = 4, 32, 32, 8, 8
    squeeze_ratio, expansion_ratio = 0.25, 4
    mid = int(Cin * expansion_ratio)   # 128
    sqz = int(Cin * squeeze_ratio)     # 8

    kx, kp = jax.random.split(key)
    x = jax.random.normal(kx, (N, Cin, H, W), jnp.float32)
    params = init_params(kp, Cin, Cout, mid, sqz)
    folded = fold_params(params)       # one-time constant folding / weight prep

    out = mbconv2_pallas(x, folded, n_blk=2)
    out = jax.block_until_ready(out)

    ref = mbconv2_ref(x, params)
    err = float(jnp.max(jnp.abs(out - ref)))
    scale = float(jnp.max(jnp.abs(ref)))
    assert out.shape == (N, Cout, H, W), out.shape
    # bf16 MXU operands (f32 accumulation) vs f32-HIGHEST reference -> relative check
    assert err <= 2e-2 * max(scale, 1.0), f"abs err {err} (ref scale {scale})"
    print("KERNEL_OK")
</pallas_src>

<mosaic_0001>
module attributes {stable_mosaic.version = 11 : i64} {
  func.func @mbconv2_kernel(%arg0: i32, %arg1: memref<2x8x8x32xf32, #tpu.memory_space<vmem>>, %arg2: memref<32x256xbf16, #tpu.memory_space<vmem>>, %arg3: memref<1x256xf32, #tpu.memory_space<vmem>>, %arg4: memref<1152x128xbf16, #tpu.memory_space<vmem>>, %arg5: memref<1x128xf32, #tpu.memory_space<vmem>>, %arg6: memref<128x8xbf16, #tpu.memory_space<vmem>>, %arg7: memref<1x8xf32, #tpu.memory_space<vmem>>, %arg8: memref<8x128xbf16, #tpu.memory_space<vmem>>, %arg9: memref<1x128xf32, #tpu.memory_space<vmem>>, %arg10: memref<128x128xbf16, #tpu.memory_space<vmem>>, %arg11: memref<1x128xf32, #tpu.memory_space<vmem>>, %arg12: memref<2x8x8x128xf32, #tpu.memory_space<vmem>>, %arg13: memref<2x10x10x128xf32, #tpu.memory_space<vmem>>) attributes {dimension_semantics = [#tpu.dimension_semantics<parallel>], iteration_bounds = array<i64: 2>, scalar_prefetch = 0 : i64, scratch_operands = 1 : i64, tpu.core_type = #tpu.core_type<tc>, window_params = [{transform_indices = @transform_0, window_bounds = array<i64: 2, 8, 8, 32>}, {pipeline_mode = #tpu.pipeline_mode<synchronous>, transform_indices = @transform_1, window_bounds = array<i64: 32, 256>}, {pipeline_mode = #tpu.pipeline_mode<synchronous>, transform_indices = @transform_2, window_bounds = array<i64: 1, 256>}, {pipeline_mode = #tpu.pipeline_mode<synchronous>, transform_indices = @transform_3, window_bounds = array<i64: 1152, 128>}, {pipeline_mode = #tpu.pipeline_mode<synchronous>, transform_indices = @transform_4, window_bounds = array<i64: 1, 128>}, {pipeline_mode = #tpu.pipeline_mode<synchronous>, transform_indices = @transform_5, window_bounds = array<i64: 128, 8>}, {pipeline_mode = #tpu.pipeline_mode<synchronous>, transform_indices = @transform_6, window_bounds = array<i64: 1, 8>}, {pipeline_mode = #tpu.pipeline_mode<synchronous>, transform_indices = @transform_7, window_bounds = array<i64: 8, 128>}, {pipeline_mode = #tpu.pipeline_mode<synchronous>, transform_indices = @transform_8, window_bounds = array<i64: 1, 128>}, {pipeline_mode = #tpu.pipeline_mode<synchronous>, transform_indices = @transform_9, window_bounds = array<i64: 128, 128>}, {pipeline_mode = #tpu.pipeline_mode<synchronous>, transform_indices = @transform_10, window_bounds = array<i64: 1, 128>}, {transform_indices = @transform_11, window_bounds = array<i64: 2, 8, 8, 128>}]} {
    %c0 = arith.constant 0 : index
    %c0_0 = arith.constant 0 : index
    %c0_1 = arith.constant 0 : index
    %c0_2 = arith.constant 0 : index
    %0 = vector.load %arg1[%c0, %c0_0, %c0_1, %c0_2] : memref<2x8x8x32xf32, #tpu.memory_space<vmem>>, vector<2x8x8x32xf32>
    %1 = vector.shape_cast %0 : vector<2x8x8x32xf32> to vector<128x32xf32>
    %2 = arith.truncf %1 : vector<128x32xf32> to vector<128x32xbf16>
    %c0_3 = arith.constant 0 : index
    %c0_4 = arith.constant 0 : index
    %3 = vector.load %arg2[%c0_3, %c0_4] : memref<32x256xbf16, #tpu.memory_space<vmem>>, vector<32x256xbf16>
    %cst = arith.constant dense<0.000000e+00> : vector<128x256xf32>
    %4 = tpu.matmul %2, %3, %cst {dimension_numbers = #tpu.dot_dimension_numbers<[1], [0], [0], [1], [0, 0, 1, 1], [], []>} : vector<128x32xbf16>, vector<32x256xbf16>, vector<128x256xf32> -> vector<128x256xf32>
    %c0_5 = arith.constant 0 : index
    %c0_6 = arith.constant 0 : index
    %5 = vector.load %arg3[%c0_5, %c0_6] : memref<1x256xf32, #tpu.memory_space<vmem>>, vector<1x256xf32>
    %6 = vector.broadcast %5 : vector<1x256xf32> to vector<128x256xf32>
    %7 = arith.addf %4, %6 : vector<128x256xf32>
    %8 = vector.extract_strided_slice %7 {offsets = [0, 0], sizes = [128, 128], strides = [1, 1]} : vector<128x256xf32> to vector<128x128xf32>
    %9 = vector.extract_strided_slice %7 {offsets = [0, 128], sizes = [128, 128], strides = [1, 1]} : vector<128x256xf32> to vector<128x128xf32>
    %cst_7 = arith.constant 5.000000e-01 : f32
    %10 = vector.broadcast %cst_7 : f32 to vector<128x128xf32>
    %11 = arith.mulf %10, %9 : vector<128x128xf32>
    %cst_8 = arith.constant 0.707106769 : f32
    %12 = vector.broadcast %cst_8 : f32 to vector<128x128xf32>
    %13 = arith.mulf %9, %12 : vector<128x128xf32>
    %14 = math.erf %13 : vector<128x128xf32>
    %cst_9 = arith.constant 1.000000e+00 : f32
    %15 = vector.broadcast %cst_9 : f32 to vector<128x128xf32>
    %16 = arith.addf %15, %14 : vector<128x128xf32>
    %17 = arith.mulf %11, %16 : vector<128x128xf32>
    %cst_10 = arith.constant 0.000000e+00 : f32
    %18 = vector.broadcast %cst_10 : f32 to vector<2x1x10x128xf32>
    %cst_11 = arith.constant 0.000000e+00 : f32
    %19 = vector.broadcast %cst_11 : f32 to vector<2x8x1x128xf32>
    %c0_12 = arith.constant 0 : index
    %c0_13 = arith.constant 0 : index
    %c0_14 = arith.constant 0 : index
    %c0_15 = arith.constant 0 : index
    %20 = vector.load %arg13[%c0_12, %c0_13, %c0_14, %c0_15] : memref<2x10x10x128xf32, #tpu.memory_space<vmem>>, vector<2x1x10x128xf32>
    tpu.vector_store %arg13[%c0_12, %c0_13, %c0_14, %c0_15], %18 {strides = array<i32>} : memref<2x10x10x128xf32, #tpu.memory_space<vmem>>, vector<2x1x10x128xf32>,
    %c0_16 = arith.constant 0 : index
    %c9 = arith.constant 9 : index
    %c0_17 = arith.constant 0 : index
    %c0_18 = arith.constant 0 : index
    %21 = vector.load %arg13[%c0_16, %c9, %c0_17, %c0_18] : memref<2x10x10x128xf32, #tpu.memory_space<vmem>>, vector<2x1x10x128xf32>
    tpu.vector_store %arg13[%c0_16, %c9, %c0_17, %c0_18], %18 {strides = array<i32>} : memref<2x10x10x128xf32, #tpu.memory_space<vmem>>, vector<2x1x10x128xf32>,
    %c0_19 = arith.constant 0 : index
    %c1 = arith.constant 1 : index
    %c0_20 = arith.constant 0 : index
    %c0_21 = arith.constant 0 : index
    %22 = vector.load %arg13[%c0_19, %c1, %c0_20, %c0_21] : memref<2x10x10x128xf32, #tpu.memory_space<vmem>>, vector<2x8x1x128xf32>
    tpu.vector_store %arg13[%c0_19, %c1, %c0_20, %c0_21], %19 {strides = array<i32>} : memref<2x10x10x128xf32, #tpu.memory_space<vmem>>, vector<2x8x1x128xf32>,
    %c0_22 = arith.constant 0 : index
    %c1_23 = arith.constant 1 : index
    %c9_24 = arith.constant 9 : index
    %c0_25 = arith.constant 0 : index
    %23 = vector.load %arg13[%c0_22, %c1_23, %c9_24, %c0_25] : memref<2x10x10x128xf32, #tpu.memory_space<vmem>>, vector<2x8x1x128xf32>
    tpu.vector_store %arg13[%c0_22, %c1_23, %c9_24, %c0_25], %19 {strides = array<i32>} : memref<2x10x10x128xf32, #tpu.memory_space<vmem>>, vector<2x8x1x128xf32>,
    %24 = vector.shape_cast %17 : vector<128x128xf32> to vector<2x8x8x128xf32>
    %c0_26 = arith.constant 0 : index
    %c1_27 = arith.constant 1 : index
    %c1_28 = arith.constant 1 : index
    %c0_29 = arith.constant 0 : index
    %25 = vector.load %arg13[%c0_26, %c1_27, %c1_28, %c0_29] : memref<2x10x10x128xf32, #tpu.memory_space<vmem>>, vector<2x8x8x128xf32>
    tpu.vector_store %arg13[%c0_26, %c1_27, %c1_28, %c0_29], %24 {strides = array<i32>} : memref<2x10x10x128xf32, #tpu.memory_space<vmem>>, vector<2x8x8x128xf32>,
    %c0_30 = arith.constant 0 : index
    %c0_31 = arith.constant 0 : index
    %c0_32 = arith.constant 0 : index
    %c0_33 = arith.constant 0 : index
    %26 = vector.load %arg13[%c0_30, %c0_31, %c0_32, %c0_33] : memref<2x10x10x128xf32, #tpu.memory_space<vmem>>, vector<2x8x8x128xf32>
    %27 = vector.shape_cast %26 : vector<2x8x8x128xf32> to vector<128x128xf32>
    %28 = arith.truncf %27 : vector<128x128xf32> to vector<128x128xbf16>
    %c0_34 = arith.constant 0 : index
    %c0_35 = arith.constant 0 : index
    %c1_36 = arith.constant 1 : index
    %c0_37 = arith.constant 0 : index
    %29 = vector.load %arg13[%c0_34, %c0_35, %c1_36, %c0_37] : memref<2x10x10x128xf32, #tpu.memory_space<vmem>>, vector<2x8x8x128xf32>
    %30 = vector.shape_cast %29 : vector<2x8x8x128xf32> to vector<128x128xf32>
    %31 = arith.truncf %30 : vector<128x128xf32> to vector<128x128xbf16>
    %c0_38 = arith.constant 0 : index
    %c0_39 = arith.constant 0 : index
    %c2 = arith.constant 2 : index
    %c0_40 = arith.constant 0 : index
    %32 = vector.load %arg13[%c0_38, %c0_39, %c2, %c0_40] : memref<2x10x10x128xf32, #tpu.memory_space<vmem>>, vector<2x8x8x128xf32>
    %33 = vector.shape_cast %32 : vector<2x8x8x128xf32> to vector<128x128xf32>
    %34 = arith.truncf %33 : vector<128x128xf32> to vector<128x128xbf16>
    %c0_41 = arith.constant 0 : index
    %c1_42 = arith.constant 1 : index
    %c0_43 = arith.constant 0 : index
    %c0_44 = arith.constant 0 : index
    %35 = vector.load %arg13[%c0_41, %c1_42, %c0_43, %c0_44] : memref<2x10x10x128xf32, #tpu.memory_space<vmem>>, vector<2x8x8x128xf32>
    %36 = vector.shape_cast %35 : vector<2x8x8x128xf32> to vector<128x128xf32>
    %37 = arith.truncf %36 : vector<128x128xf32> to vector<128x128xbf16>
    %c0_45 = arith.constant 0 : index
    %c1_46 = arith.constant 1 : index
    %c1_47 = arith.constant 1 : index
    %c0_48 = arith.constant 0 : index
    %38 = vector.load %arg13[%c0_45, %c1_46, %c1_47, %c0_48] : memref<2x10x10x128xf32, #tpu.memory_space<vmem>>, vector<2x8x8x128xf32>
    %39 = vector.shape_cast %38 : vector<2x8x8x128xf32> to vector<128x128xf32>
    %40 = arith.truncf %39 : vector<128x128xf32> to vector<128x128xbf16>
    %c0_49 = arith.constant 0 : index
    %c1_50 = arith.constant 1 : index
    %c2_51 = arith.constant 2 : index
    %c0_52 = arith.constant 0 : index
    %41 = vector.load %arg13[%c0_49, %c1_50, %c2_51, %c0_52] : memref<2x10x10x128xf32, #tpu.memory_space<vmem>>, vector<2x8x8x128xf32>
    %42 = vector.shape_cast %41 : vector<2x8x8x128xf32> to vector<128x128xf32>
    %43 = arith.truncf %42 : vector<128x128xf32> to vector<128x128xbf16>
    %c0_53 = arith.constant 0 : index
    %c2_54 = arith.constant 2 : index
    %c0_55 = arith.constant 0 : index
    %c0_56 = arith.constant 0 : index
    %44 = vector.load %arg13[%c0_53, %c2_54, %c0_55, %c0_56] : memref<2x10x10x128xf32, #tpu.memory_space<vmem>>, vector<2x8x8x128xf32>
    %45 = vector.shape_cast %44 : vector<2x8x8x128xf32> to vector<128x128xf32>
    %46 = arith.truncf %45 : vector<128x128xf32> to vector<128x128xbf16>
    %c0_57 = arith.constant 0 : index
    %c2_58 = arith.constant 2 : index
    %c1_59 = arith.constant 1 : index
    %c0_60 = arith.constant 0 : index
    %47 = vector.load %arg13[%c0_57, %c2_58, %c1_59, %c0_60] : memref<2x10x10x128xf32, #tpu.memory_space<vmem>>, vector<2x8x8x128xf32>
    %48 = vector.shape_cast %47 : vector<2x8x8x128xf32> to vector<128x128xf32>
    %49 = arith.truncf %48 : vector<128x128xf32> to vector<128x128xbf16>
    %c0_61 = arith.constant 0 : index
    %c2_62 = arith.constant 2 : index
    %c2_63 = arith.constant 2 : index
    %c0_64 = arith.constant 0 : index
    %50 = vector.load %arg13[%c0_61, %c2_62, %c2_63, %c0_64] : memref<2x10x10x128xf32, #tpu.memory_space<vmem>>, vector<2x8x8x128xf32>
    %51 = vector.shape_cast %50 : vector<2x8x8x128xf32> to vector<128x128xf32>
    %52 = arith.truncf %51 : vector<128x128xf32> to vector<128x128xbf16>
    %53 = tpu.concatenate %28, %31, %34, %37, %40, %43, %46, %49, %52 in 1 : vector<128x128xbf16>, vector<128x128xbf16>, vector<128x128xbf16>, vector<128x128xbf16>, vector<128x128xbf16>, vector<128x128xbf16>, vector<128x128xbf16>, vector<128x128xbf16>, vector<128x128xbf16> -> vector<128x1152xbf16>
    %c0_65 = arith.constant 0 : index
    %c0_66 = arith.constant 0 : index
    %54 = vector.load %arg4[%c0_65, %c0_66] : memref<1152x128xbf16, #tpu.memory_space<vmem>>, vector<1152x128xbf16>
    %cst_67 = arith.constant dense<0.000000e+00> : vector<128x128xf32>
    %55 = tpu.matmul %53, %54, %cst_67 {dimension_numbers = #tpu.dot_dimension_numbers<[1], [0], [0], [1], [0, 0, 1, 1], [], []>} : vector<128x1152xbf16>, vector<1152x128xbf16>, vector<128x128xf32> -> vector<128x128xf32>
    %c0_68 = arith.constant 0 : index
    %c0_69 = arith.constant 0 : index
    %56 = vector.load %arg5[%c0_68, %c0_69] : memref<1x128xf32, #tpu.memory_space<vmem>>, vector<1x128xf32>
    %57 = vector.broadcast %56 : vector<1x128xf32> to vector<128x128xf32>
    %58 = arith.addf %55, %57 : vector<128x128xf32>
    %cst_70 = arith.constant 5.000000e-01 : f32
    %59 = vector.broadcast %cst_70 : f32 to vector<128x128xf32>
    %60 = arith.mulf %59, %58 : vector<128x128xf32>
    %cst_71 = arith.constant 0.707106769 : f32
    %61 = vector.broadcast %cst_71 : f32 to vector<128x128xf32>
    %62 = arith.mulf %58, %61 : vector<128x128xf32>
    %63 = math.erf %62 : vector<128x128xf32>
    %cst_72 = arith.constant 1.000000e+00 : f32
    %64 = vector.broadcast %cst_72 : f32 to vector<128x128xf32>
    %65 = arith.addf %64, %63 : vector<128x128xf32>
    %66 = arith.mulf %60, %65 : vector<128x128xf32>
    %67 = vector.shape_cast %66 : vector<128x128xf32> to vector<2x64x128xf32>
    %cst_73 = arith.constant dense<0.000000e+00> : vector<2x128xf32>
    %68 = vector.multi_reduction <add>, %67, %cst_73 [1] : vector<2x64x128xf32> to vector<2x128xf32>
    %cst_74 = arith.constant 6.400000e+01 : f32
    %69 = vector.broadcast %cst_74 : f32 to vector<2x128xf32>
    %70 = arith.divf %68, %69 : vector<2x128xf32>
    %71 = arith.truncf %70 : vector<2x128xf32> to vector<2x128xbf16>
    %c0_75 = arith.constant 0 : index
    %c0_76 = arith.constant 0 : index
    %72 = vector.load %arg6[%c0_75, %c0_76] : memref<128x8xbf16, #tpu.memory_space<vmem>>, vector<128x8xbf16>
    %cst_77 = arith.constant dense<0.000000e+00> : vector<2x8xf32>
    %73 = tpu.matmul %71, %72, %cst_77 {dimension_numbers = #tpu.dot_dimension_numbers<[1], [0], [0], [1], [0, 0, 1, 1], [], []>} : vector<2x128xbf16>, vector<128x8xbf16>, vector<2x8xf32> -> vector<2x8xf32>
    %c0_78 = arith.constant 0 : index
    %c0_79 = arith.constant 0 : index
    %74 = vector.load %arg7[%c0_78, %c0_79] : memref<1x8xf32, #tpu.memory_space<vmem>>, vector<1x8xf32>
    %75 = vector.broadcast %74 : vector<1x8xf32> to vector<2x8xf32>
    %76 = arith.addf %73, %75 : vector<2x8xf32>
    %77 = arith.negf %76 : vector<2x8xf32>
    %78 = math.exp %77 : vector<2x8xf32>
    %cst_80 = arith.constant 1.000000e+00 : f32
    %79 = vector.broadcast %cst_80 : f32 to vector<2x8xf32>
    %80 = arith.addf %79, %78 : vector<2x8xf32>
    %81 = arith.divf %79, %80 : vector<2x8xf32>
    %82 = arith.mulf %76, %81 : vector<2x8xf32>
    %83 = arith.truncf %82 : vector<2x8xf32> to vector<2x8xbf16>
    %c0_81 = arith.constant 0 : index
    %c0_82 = arith.constant 0 : index
    %84 = vector.load %arg8[%c0_81, %c0_82] : memref<8x128xbf16, #tpu.memory_space<vmem>>, vector<8x128xbf16>
    %cst_83 = arith.constant dense<0.000000e+00> : vector<2x128xf32>
    %85 = tpu.matmul %83, %84, %cst_83 {dimension_numbers = #tpu.dot_dimension_numbers<[1], [0], [0], [1], [0, 0, 1, 1], [], []>} : vector<2x8xbf16>, vector<8x128xbf16>, vector<2x128xf32> -> vector<2x128xf32>
    %c0_84 = arith.constant 0 : index
    %c0_85 = arith.constant 0 : index
    %86 = vector.load %arg9[%c0_84, %c0_85] : memref<1x128xf32, #tpu.memory_space<vmem>>, vector<1x128xf32>
    %87 = vector.broadcast %86 : vector<1x128xf32> to vector<2x128xf32>
    %88 = arith.addf %85, %87 : vector<2x128xf32>
    %89 = arith.negf %88 : vector<2x128xf32>
    %90 = math.exp %89 : vector<2x128xf32>
    %cst_86 = arith.constant 1.000000e+00 : f32
    %91 = vector.broadcast %cst_86 : f32 to vector<2x128xf32>
    %92 = arith.addf %91, %90 : vector<2x128xf32>
    %93 = arith.divf %91, %92 : vector<2x128xf32>
    %94 = vector.shape_cast %93 : vector<2x128xf32> to vector<2x1x128xf32>
    %95 = vector.broadcast %94 : vector<2x1x128xf32> to vector<2x64x128xf32>
    %96 = arith.mulf %67, %95 : vector<2x64x128xf32>
    %97 = vector.shape_cast %96 : vector<2x64x128xf32> to vector<128x128xf32>
    %98 = arith.truncf %97 : vector<128x128xf32> to vector<128x128xbf16>
    %c0_87 = arith.constant 0 : index
    %c0_88 = arith.constant 0 : index
    %99 = vector.load %arg10[%c0_87, %c0_88] : memref<128x128xbf16, #tpu.memory_space<vmem>>, vector<128x128xbf16>
    %cst_89 = arith.constant dense<0.000000e+00> : vector<128x128xf32>
    %100 = tpu.matmul %98, %99, %cst_89 {dimension_numbers = #tpu.dot_dimension_numbers<[1], [0], [0], [1], [0, 0, 1, 1], [], []>} : vector<128x128xbf16>, vector<128x128xbf16>, vector<128x128xf32> -> vector<128x128xf32>
    %c0_90 = arith.constant 0 : index
    %c0_91 = arith.constant 0 : index
    %101 = vector.load %arg11[%c0_90, %c0_91] : memref<1x128xf32, #tpu.memory_space<vmem>>, vector<1x128xf32>
    %102 = vector.broadcast %101 : vector<1x128xf32> to vector<128x128xf32>
    %103 = arith.addf %100, %102 : vector<128x128xf32>
    %104 = arith.addf %103, %8 : vector<128x128xf32>
    %105 = vector.shape_cast %104 : vector<128x128xf32> to vector<2x8x8x128xf32>
    %c0_92 = arith.constant 0 : index
    %c0_93 = arith.constant 0 : index
    %c0_94 = arith.constant 0 : index
    %c0_95 = arith.constant 0 : index
    %106 = vector.load %arg12[%c0_92, %c0_93, %c0_94, %c0_95] : memref<2x8x8x128xf32, #tpu.memory_space<vmem>>, vector<2x8x8x128xf32>
    tpu.vector_store %arg12[%c0_92, %c0_93, %c0_94, %c0_95], %105 {strides = array<i32>} : memref<2x8x8x128xf32, #tpu.memory_space<vmem>>, vector<2x8x8x128xf32>,
    return
  }
  func.func @transform_0(%arg0: i32) -> (i32, i32, i32, i32) {
    %c0_i32 = arith.constant 0 : i32
    %c0_i32_0 = arith.constant 0 : i32
    %c0_i32_1 = arith.constant 0 : i32
    %c0_i32_2 = arith.constant 0 : i32
    return %arg0, %c0_i32, %c0_i32_0, %c0_i32_1 : i32, i32, i32, i32
  }
  func.func @transform_1(%arg0: i32) -> (i32, i32) {
    %c0_i32 = arith.constant 0 : i32
    %c0_i32_0 = arith.constant 0 : i32
    %c0_i32_1 = arith.constant 0 : i32
    return %c0_i32, %c0_i32_0 : i32, i32
  }
  func.func @transform_2(%arg0: i32) -> (i32, i32) {
    %c0_i32 = arith.constant 0 : i32
    %c0_i32_0 = arith.constant 0 : i32
    %c0_i32_1 = arith.constant 0 : i32
    return %c0_i32, %c0_i32_0 : i32, i32
  }
  func.func @transform_3(%arg0: i32) -> (i32, i32) {
    %c0_i32 = arith.constant 0 : i32
    %c0_i32_0 = arith.constant 0 : i32
    %c0_i32_1 = arith.constant 0 : i32
    return %c0_i32, %c0_i32_0 : i32, i32
  }
  func.func @transform_4(%arg0: i32) -> (i32, i32) {
    %c0_i32 = arith.constant 0 : i32
    %c0_i32_0 = arith.constant 0 : i32
    %c0_i32_1 = arith.constant 0 : i32
    return %c0_i32, %c0_i32_0 : i32, i32
  }
  func.func @transform_5(%arg0: i32) -> (i32, i32) {
    %c0_i32 = arith.constant 0 : i32
    %c0_i32_0 = arith.constant 0 : i32
    %c0_i32_1 = arith.constant 0 : i32
    return %c0_i32, %c0_i32_0 : i32, i32
  }
  func.func @transform_6(%arg0: i32) -> (i32, i32) {
    %c0_i32 = arith.constant 0 : i32
    %c0_i32_0 = arith.constant 0 : i32
    %c0_i32_1 = arith.constant 0 : i32
    return %c0_i32, %c0_i32_0 : i32, i32
  }
  func.func @transform_7(%arg0: i32) -> (i32, i32) {
    %c0_i32 = arith.constant 0 : i32
    %c0_i32_0 = arith.constant 0 : i32
    %c0_i32_1 = arith.constant 0 : i32
    return %c0_i32, %c0_i32_0 : i32, i32
  }
  func.func @transform_8(%arg0: i32) -> (i32, i32) {
    %c0_i32 = arith.constant 0 : i32
    %c0_i32_0 = arith.constant 0 : i32
    %c0_i32_1 = arith.constant 0 : i32
    return %c0_i32, %c0_i32_0 : i32, i32
  }
  func.func @transform_9(%arg0: i32) -> (i32, i32) {
    %c0_i32 = arith.constant 0 : i32
    %c0_i32_0 = arith.constant 0 : i32
    %c0_i32_1 = arith.constant 0 : i32
    return %c0_i32, %c0_i32_0 : i32, i32
  }
  func.func @transform_10(%arg0: i32) -> (i32, i32) {
    %c0_i32 = arith.constant 0 : i32
    %c0_i32_0 = arith.constant 0 : i32
    %c0_i32_1 = arith.constant 0 : i32
    return %c0_i32, %c0_i32_0 : i32, i32
  }
  func.func @transform_11(%arg0: i32) -> (i32, i32, i32, i32) {
    %c0_i32 = arith.constant 0 : i32
    %c0_i32_0 = arith.constant 0 : i32
    %c0_i32_1 = arith.constant 0 : i32
    %c0_i32_2 = arith.constant 0 : i32
    return %arg0, %c0_i32, %c0_i32_0, %c0_i32_1 : i32, i32, i32, i32
  }
}

</mosaic_0001>

<llo_original>
// kernel: tpu_custom_call.1
$region0: #{tpu_custom_call.1}
  #allocation0 [shape = 'u32[]', space=smem, size = 0x4, offset = 0x4, fixed_abs, tag = 'smem constant byte address 0x4 - core index']
  #allocation1 [shape = 'u32[144,128]{1,0:T(1,128)}', space=vmem, size = 0x12000, scoped, tag = 'internal scratch']
  #allocation2 [shape = 'f32[2,10,10,128]{3,2,1,0:T(8,128)}', space=vmem, size = 0x28000, scoped, tag = 'scratch operand']
  %s0 = inlined_call_operand.hbm [shape: f32[4,8,8,32], index: 0, kind: input, shape index: {}]
  %s1 = inlined_call_operand.vmem [shape: bf16[32,256], index: 1, kind: input, shape index: {}]
  %s2 = inlined_call_operand.vmem [shape: f32[1,256], index: 2, kind: input, shape index: {}]
  %s3 = inlined_call_operand.hbm [shape: bf16[1152,128], index: 3, kind: input, shape index: {}]
  %s4 = inlined_call_operand.hbm [shape: f32[1,128], index: 4, kind: input, shape index: {}]
  %s5 = inlined_call_operand.vmem [shape: bf16[128,8], index: 5, kind: input, shape index: {}]
  %s6 = inlined_call_operand.hbm [shape: f32[1,8], index: 6, kind: input, shape index: {}]
  %s7 = inlined_call_operand.vmem [shape: bf16[8,128], index: 7, kind: input, shape index: {}]
  %s8 = inlined_call_operand.hbm [shape: f32[1,128], index: 8, kind: input, shape index: {}]
  %s9 = inlined_call_operand.vmem [shape: bf16[128,128], index: 9, kind: input, shape index: {}]
  %s10 = inlined_call_operand.vmem [shape: f32[1,128], index: 10, kind: input, shape index: {}]
  %s11 = inlined_call_operand.hbm [shape: f32[4,8,8,128], index: 11, kind: output, shape index: {}]
  %s12 = sld [smem:[#allocation0]]
  $region97: #{tpu_custom_call.1} parent=0
    _
  %s14 = ssub.s32 1, %s12
  %s15 = scalar_select 0, %s14, %s12
  $region1: #{tpu_custom_call.1} parent=0
    #allocation3 [shape = 'u8[131072]{0}', space=vmem, size = 0x20000, scoped, tag = 'input window, operand 0']
    #allocation4 [shape = 's32[2]{0}', space=sflag, size = 0x8, scoped, tag = 'scoped memory for tpu_custom_call.1']
    #allocation5 [shape = 's32[2]{0}', space=sflag, size = 0x8, scoped, tag = 'scoped memory for tpu_custom_call.1']
    #allocation6 [shape = 'u8[294912]{0}', space=vmem, size = 0x48000, scoped, tag = 'input window, operand 3, single buffered']
    #allocation7 [shape = 's32[1]{0}', space=sflag, size = 0x4, scoped, tag = 'scoped memory for tpu_custom_call.1']
    #allocation8 [shape = 'u8[512]{0}', space=vmem, size = 0x400, scoped, tag = 'input window, operand 4, single buffered']
    #allocation9 [shape = 'u8[512]{0}', space=vmem, size = 0x400, scoped, tag = 'input window, operand 6, single buffered']
    #allocation10 [shape = 's32[1]{0}', space=sflag, size = 0x4, scoped, tag = 'scoped memory for tpu_custom_call.1']
    #allocation11 [shape = 'u8[512]{0}', space=vmem, size = 0x400, scoped, tag = 'input window, operand 8, single buffered']
    #allocation12 [shape = 'u8[131072]{0}', space=vmem, size = 0x20000, scoped, tag = 'output window, operand 0']
    %16 = vsyncpa [#allocation4], 0
    %s17 = scalar_lea.sflag [#allocation4], 1
    %18 = vsyncpa %s17, 0
    %19 = vsyncpa [#allocation7], 0
    %20 = vsyncpa [#allocation10], 0
    %21 = vsyncpa [#allocation5], 0
    %s22 = scalar_lea.sflag [#allocation5], 1
    %23 = vsyncpa %s22, 0
    loop: start=0, step=1, limit=4
    $region2: #{tpu_custom_call.1} parent=1 // loop_pre_header
      _
    $region3: #{tpu_custom_call.1} parent=1 // loop_header
      %s25 = sphi 0, %s29
      %p26 = scmp.ge.s32.totalorder %s25, 4
      %s35 = sphi 0, %s37
      %s38 = sphi 0, %s35
      %s39 = sphi 0, %s38
      %s55 = sphi 0, %s39
      %s59 = sphi 0, %s59
      %s61 = sphi 0, %s59
      %s62 = sphi 0, %s61
      %s76 = sphi 0, %s62
      %s80 = sphi 0, %s80
      %s82 = sphi 0, %s80
      %s83 = sphi 0, %s82
      %s97 = sphi 0, %s83
      %s101 = sphi 0, %s101
      %s103 = sphi 0, %s101
      %s104 = sphi 0, %s103
      %s118 = sphi 0, %s104
      %s122 = sphi 0, %s122
      %s124 = sphi 0, %s122
      %s125 = sphi 0, %s124
      %s139 = sphi 0, %s125
      %s143 = sphi 0, %s143
      %s145 = sphi 0, %s143
      %s146 = sphi 0, %s145
      %s160 = sphi 0, %s146
      %s164 = sphi 0, %s164
      %s166 = sphi 0, %s164
      %s167 = sphi 0, %s166
      %s181 = sphi 0, %s167
      %s185 = sphi 0, %s185
      %s187 = sphi 0, %s185
      %s188 = sphi 0, %s187
      %s202 = sphi 0, %s188
      %s206 = sphi 0, %s206
      %s208 = sphi 0, %s206
      %s209 = sphi 0, %s208
      %s223 = sphi 0, %s209
      %s227 = sphi 0, %s227
      %s229 = sphi 0, %s227
      %s230 = sphi 0, %s229
      %s244 = sphi 0, %s230
      %s248 = sphi 0, %s248
      %s250 = sphi 0, %s248
      %s251 = sphi 0, %s250
      %s265 = sphi 0, %s251
      %s271 = sphi 0, %s273
      %s274 = sphi 0, %s271
      %s275 = sphi 0, %s274
      %s291 = sphi 0, %s275
    $region4: #{tpu_custom_call.1} parent=1 // loop_header_branch
      %28 = sbr.rel (%p26) target = $region8
    $region5: #{tpu_custom_call.1} parent=1 // loop_body
      %s30 = ssub.s32 %s25, 1
      %s31 = ssub.s32 %s25, 2
      %s32 = sadd.s32 %s25, 1
      %s33 = ssub.s32 %s25, %s32
      %p34 = scmp.eq.s32.totalorder %s33, 0
      %s36 = sadd.s32 %s35, 1
      %s37 = scalar_select %p34, %s35, %s36
      %p40 = pneg %p34
      %p41 = scmp.eq.s32.totalorder %s25, 1
      %p42 = por %p40, %p41
      %p43 = scmp.ne.s32.totalorder %s35, %s38
      %p44 = scmp.eq.s32.totalorder %s25, 0
      %p45 = por %p43, %p44
      %p46 = scmp.ne.s32.totalorder %s35, %s38
      %p47 = scmp.eq.s32.totalorder %s30, 1
      %p48 = por %p46, %p47
      %p49 = scmp.ne.s32.totalorder %s38, %s39
      %p50 = scmp.eq.s32.totalorder %s30, 0
      %p51 = por %p49, %p50
      %p52 = scmp.ne.s32.totalorder %s38, %s39
      %p53 = scmp.eq.s32.totalorder %s31, 1
      %p54 = por %p52, %p53
      %p56 = scmp.ne.s32.totalorder %s39, %s55
      %p57 = scmp.eq.s32.totalorder %s31, 0
      %p58 = por %p56, %p57
      %s60 = sadd.s32 %s59, 1
      %p63 = scmp.eq.s32.totalorder %s25, 1
      %p64 = scmp.ne.s32.totalorder %s59, %s61
      %p65 = scmp.eq.s32.totalorder %s25, 0
      %p66 = por %p64, %p65
      %p67 = scmp.ne.s32.totalorder %s59, %s61
      %p68 = scmp.eq.s32.totalorder %s30, 1
      %p69 = por %p67, %p68
      %p70 = scmp.ne.s32.totalorder %s61, %s62
      %p71 = scmp.eq.s32.totalorder %s30, 0
      %p72 = por %p70, %p71
      %p73 = scmp.ne.s32.totalorder %s61, %s62
      %p74 = scmp.eq.s32.totalorder %s31, 1
      %p75 = por %p73, %p74
      %p77 = scmp.ne.s32.totalorder %s62, %s76
      %p78 = scmp.eq.s32.totalorder %s31, 0
      %p79 = por %p77, %p78
      %s81 = sadd.s32 %s80, 1
      %p84 = scmp.eq.s32.totalorder %s25, 1
      %p85 = scmp.ne.s32.totalorder %s80, %s82
      %p86 = scmp.eq.s32.totalorder %s25, 0
      %p87 = por %p85, %p86
      %p88 = scmp.ne.s32.totalorder %s80, %s82
      %p89 = scmp.eq.s32.totalorder %s30, 1
      %p90 = por %p88, %p89
      %p91 = scmp.ne.s32.totalorder %s82, %s83
      %p92 = scmp.eq.s32.totalorder %s30, 0
      %p93 = por %p91, %p92
      %p94 = scmp.ne.s32.totalorder %s82, %s83
      %p95 = scmp.eq.s32.totalorder %s31, 1
      %p96 = por %p94, %p95
      %p98 = scmp.ne.s32.totalorder %s83, %s97
      %p99 = scmp.eq.s32.totalorder %s31, 0
      %p100 = por %p98, %p99
      %s102 = sadd.s32 %s101, 1
      %p105 = scmp.eq.s32.totalorder %s25, 1
      %p106 = scmp.ne.s32.totalorder %s101, %s103
      %p107 = scmp.eq.s32.totalorder %s25, 0
      %p108 = por %p106, %p107
      %p109 = scmp.ne.s32.totalorder %s101, %s103
      %p110 = scmp.eq.s32.totalorder %s30, 1
      %p111 = por %p109, %p110
      %p112 = scmp.ne.s32.totalorder %s103, %s104
      %p113 = scmp.eq.s32.totalorder %s30, 0
      %p114 = por %p112, %p113
      %p115 = scmp.ne.s32.totalorder %s103, %s104
      %p116 = scmp.eq.s32.totalorder %s31, 1
      %p117 = por %p115, %p116
      %p119 = scmp.ne.s32.totalorder %s104, %s118
      %p120 = scmp.eq.s32.totalorder %s31, 0
      %p121 = por %p119, %p120
      %s123 = sadd.s32 %s122, 1
      %p126 = scmp.eq.s32.totalorder %s25, 1
      %p127 = scmp.ne.s32.totalorder %s122, %s124
      %p128 = scmp.eq.s32.totalorder %s25, 0
      %p129 = por %p127, %p128
      %p130 = scmp.ne.s32.totalorder %s122, %s124
      %p131 = scmp.eq.s32.totalorder %s30, 1
      %p132 = por %p130, %p131
      %p133 = scmp.ne.s32.totalorder %s124, %s125
      %p134 = scmp.eq.s32.totalorder %s30, 0
      %p135 = por %p133, %p134
      %p136 = scmp.ne.s32.totalorder %s124, %s125
      %p137 = scmp.eq.s32.totalorder %s31, 1
      %p138 = por %p136, %p137
      %p140 = scmp.ne.s32.totalorder %s125, %s139
      %p141 = scmp.eq.s32.totalorder %s31, 0
      %p142 = por %p140, %p141
      %s144 = sadd.s32 %s143, 1
      %p147 = scmp.eq.s32.totalorder %s25, 1
      %p148 = scmp.ne.s32.totalorder %s143, %s145
      %p149 = scmp.eq.s32.totalorder %s25, 0
      %p150 = por %p148, %p149
      %p151 = scmp.ne.s32.totalorder %s143, %s145
      %p152 = scmp.eq.s32.totalorder %s30, 1
      %p153 = por %p151, %p152
      %p154 = scmp.ne.s32.totalorder %s145, %s146
      %p155 = scmp.eq.s32.totalorder %s30, 0
      %p156 = por %p154, %p155
      %p157 = scmp.ne.s32.totalorder %s145, %s146
      %p158 = scmp.eq.s32.totalorder %s31, 1
      %p159 = por %p157, %p158
      %p161 = scmp.ne.s32.totalorder %s146, %s160
      %p162 = scmp.eq.s32.totalorder %s31, 0
      %p163 = por %p161, %p162
      %s165 = sadd.s32 %s164, 1
      %p168 = scmp.eq.s32.totalorder %s25, 1
      %p169 = scmp.ne.s32.totalorder %s164, %s166
      %p170 = scmp.eq.s32.totalorder %s25, 0
      %p171 = por %p169, %p170
      %p172 = scmp.ne.s32.totalorder %s164, %s166
      %p173 = scmp.eq.s32.totalorder %s30, 1
      %p174 = por %p172, %p173
      %p175 = scmp.ne.s32.totalorder %s166, %s167
      %p176 = scmp.eq.s32.totalorder %s30, 0
      %p177 = por %p175, %p176
      %p178 = scmp.ne.s32.totalorder %s166, %s167
      %p179 = scmp.eq.s32.totalorder %s31, 1
      %p180 = por %p178, %p179
      %p182 = scmp.ne.s32.totalorder %s167, %s181
      %p183 = scmp.eq.s32.totalorder %s31, 0
      %p184 = por %p182, %p183
      %s186 = sadd.s32 %s185, 1
      %p189 = scmp.eq.s32.totalorder %s25, 1
      %p190 = scmp.ne.s32.totalorder %s185, %s187
      %p191 = scmp.eq.s32.totalorder %s25, 0
      %p192 = por %p190, %p191
      %p193 = scmp.ne.s32.totalorder %s185, %s187
      %p194 = scmp.eq.s32.totalorder %s30, 1
      %p195 = por %p193, %p194
      %p196 = scmp.ne.s32.totalorder %s187, %s188
      %p197 = scmp.eq.s32.totalorder %s30, 0
      %p198 = por %p196, %p197
      %p199 = scmp.ne.s32.totalorder %s187, %s188
      %p200 = scmp.eq.s32.totalorder %s31, 1
      %p201 = por %p199, %p200
      %p203 = scmp.ne.s32.totalorder %s188, %s202
      %p204 = scmp.eq.s32.totalorder %s31, 0
      %p205 = por %p203, %p204
      %s207 = sadd.s32 %s206, 1
      %p210 = scmp.eq.s32.totalorder %s25, 1
      %p211 = scmp.ne.s32.totalorder %s206, %s208
      %p212 = scmp.eq.s32.totalorder %s25, 0
      %p213 = por %p211, %p212
      %p214 = scmp.ne.s32.totalorder %s206, %s208
      %p215 = scmp.eq.s32.totalorder %s30, 1
      %p216 = por %p214, %p215
      %p217 = scmp.ne.s32.totalorder %s208, %s209
      %p218 = scmp.eq.s32.totalorder %s30, 0
      %p219 = por %p217, %p218
      %p220 = scmp.ne.s32.totalorder %s208, %s209
      %p221 = scmp.eq.s32.totalorder %s31, 1
      %p222 = por %p220, %p221
      %p224 = scmp.ne.s32.totalorder %s209, %s223
      %p225 = scmp.eq.s32.totalorder %s31, 0
      %p226 = por %p224, %p225
      %s228 = sadd.s32 %s227, 1
      %p231 = scmp.eq.s32.totalorder %s25, 1
      %p232 = scmp.ne.s32.totalorder %s227, %s229
      %p233 = scmp.eq.s32.totalorder %s25, 0
      %p234 = por %p232, %p233
      %p235 = scmp.ne.s32.totalorder %s227, %s229
      %p236 = scmp.eq.s32.totalorder %s30, 1
      %p237 = por %p235, %p236
      %p238 = scmp.ne.s32.totalorder %s229, %s230
      %p239 = scmp.eq.s32.totalorder %s30, 0
      %p240 = por %p238, %p239
      %p241 = scmp.ne.s32.totalorder %s229, %s230
      %p242 = scmp.eq.s32.totalorder %s31, 1
      %p243 = por %p241, %p242
      %p245 = scmp.ne.s32.totalorder %s230, %s244
      %p246 = scmp.eq.s32.totalorder %s31, 0
      %p247 = por %p245, %p246
      %s249 = sadd.s32 %s248, 1
      %p252 = scmp.eq.s32.totalorder %s25, 1
      %p253 = scmp.ne.s32.totalorder %s248, %s250
      %p254 = scmp.eq.s32.totalorder %s25, 0
      %p255 = por %p253, %p254
      %p256 = scmp.ne.s32.totalorder %s248, %s250
      %p257 = scmp.eq.s32.totalorder %s30, 1
      %p258 = por %p256, %p257
      %p259 = scmp.ne.s32.totalorder %s250, %s251
      %p260 = scmp.eq.s32.totalorder %s30, 0
      %p261 = por %p259, %p260
      %p262 = scmp.ne.s32.totalorder %s250, %s251
      %p263 = scmp.eq.s32.totalorder %s31, 1
      %p264 = por %p262, %p263
      %p266 = scmp.ne.s32.totalorder %s251, %s265
      %p267 = scmp.eq.s32.totalorder %s31, 0
      %p268 = por %p266, %p267
      %s269 = ssub.s32 %s25, %s32
      %p270 = scmp.eq.s32.totalorder %s269, 0
      %s272 = sadd.s32 %s271, 1
      %s273 = scalar_select %p270, %s271, %s272
      %p276 = pneg %p270
      %p277 = scmp.eq.s32.totalorder %s25, 1
      %p278 = por %p276, %p277
      %p279 = scmp.ne.s32.totalorder %s271, %s274
      %p280 = scmp.eq.s32.totalorder %s25, 0
      %p281 = por %p279, %p280
      %p282 = scmp.ne.s32.totalorder %s271, %s274
      %p283 = scmp.eq.s32.totalorder %s30, 1
      %p284 = por %p282, %p283
      %p285 = scmp.ne.s32.totalorder %s274, %s275
      %p286 = scmp.eq.s32.totalorder %s30, 0
      %p287 = por %p285, %p286
      %p288 = scmp.ne.s32.totalorder %s274, %s275
      %p289 = scmp.eq.s32.totalorder %s31, 1
      %p290 = por %p288, %p289
      %p292 = scmp.ne.s32.totalorder %s275, %s291
      %p293 = scmp.eq.s32.totalorder %s31, 0
      %p294 = por %p292, %p293
      %p295 = scmp.le.s32.totalorder 1, %s25
      %p296 = scmp.lt.s32.totalorder %s25, 3
      %p297 = pnand %p295, %p296
      %p298 = pneg %p297
      // Predicated region
      $region9: #{tpu_custom_call.1} parent=5 // pred_check
        _
      $region10: #{tpu_custom_call.1} parent=5 // pred_check_branch
        %300 = sbr.rel (%p297) target = $region12
      $region11: #{tpu_custom_call.1} parent=5 // pred_region
        %s301 = ssub.s32 %s25, 1
        // Predicated region
        $region13: #{tpu_custom_call.1} parent=11 // pred_check
          %p302 = pneg %p72
        $region14: #{tpu_custom_call.1} parent=11 // pred_check_branch
          %304 = sbr.rel (%p302) target = $region16
        $region15: #{tpu_custom_call.1} parent=11 // pred_region
          _
        $region16: #{tpu_custom_call.1} parent=11 // pred_fallthru
          _
        // Predicated region
        $region17: #{tpu_custom_call.1} parent=11 // pred_check
          %p305 = pneg %p93
        $region18: #{tpu_custom_call.1} parent=11 // pred_check_branch
          %307 = sbr.rel (%p305) target = $region20
        $region19: #{tpu_custom_call.1} parent=11 // pred_region
          _
        $region20: #{tpu_custom_call.1} parent=11 // pred_fallthru
          _
        // Predicated region
        $region21: #{tpu_custom_call.1} parent=11 // pred_check
          %p308 = pneg %p114
        $region22: #{tpu_custom_call.1} parent=11 // pred_check_branch
          %310 = sbr.rel (%p308) target = $region24
        $region23: #{tpu_custom_call.1} parent=11 // pred_region
          %s312 = ssub.s32 9216, 9216
          %313 = vsyncadd [#allocation7], %s312
          %s314 = sshll.u32 [#allocation6], 4
          %s315 = int_to_ptr.vmem [resolvable:$true] %s314
          %320 = dma.hbm_to_vmem [thread:$0]  %s3, 9216, %s315, [#allocation7], 64, 64, 4
        $region24: #{tpu_custom_call.1} parent=11 // pred_fallthru
          _
        // Predicated region
        $region25: #{tpu_custom_call.1} parent=11 // pred_check
          %p321 = pneg %p135
        $region26: #{tpu_custom_call.1} parent=11 // pred_check_branch
          %323 = sbr.rel (%p321) target = $region28
        $region27: #{tpu_custom_call.1} parent=11 // pred_region
          %s325 = ssub.s32 16, 16
          %326 = vsyncadd [#allocation7], %s325
          %s328 = sshll.u32 [#allocation8], 4
          %s329 = int_to_ptr.vmem [resolvable:$true] %s328
          %331 = dma.hbm_to_vmem [thread:$0]  %s4, 16, %s329, [#allocation7]
        $region28: #{tpu_custom_call.1} parent=11 // pred_fallthru
          _
        // Predicated region
        $region29: #{tpu_custom_call.1} parent=11 // pred_check
          %p332 = pneg %p156
        $region30: #{tpu_custom_call.1} parent=11 // pred_check_branch
          %334 = sbr.rel (%p332) target = $region32
        $region31: #{tpu_custom_call.1} parent=11 // pred_region
          _
        $region32: #{tpu_custom_call.1} parent=11 // pred_fallthru
          _
        // Predicated region
        $region33: #{tpu_custom_call.1} parent=11 // pred_check
          %p335 = pneg %p177
        $region34: #{tpu_custom_call.1} parent=11 // pred_check_branch
          %337 = sbr.rel (%p335) target = $region36
        $region35: #{tpu_custom_call.1} parent=11 // pred_region
          %s339 = ssub.s32 16, 16
          %340 = vsyncadd [#allocation10], %s339
          %s342 = sshll.u32 [#allocation9], 4
          %s343 = int_to_ptr.vmem [resolvable:$true] %s342
          %345 = dma.hbm_to_vmem [thread:$0]  %s6, 16, %s343, [#allocation10]
        $region36: #{tpu_custom_call.1} parent=11 // pred_fallthru
          _
        // Predicated region
        $region37: #{tpu_custom_call.1} parent=11 // pred_check
          %p346 = pneg %p198
        $region38: #{tpu_custom_call.1} parent=11 // pred_check_branch
          %348 = sbr.rel (%p346) target = $region40
        $region39: #{tpu_custom_call.1} parent=11 // pred_region
          _
        $region40: #{tpu_custom_call.1} parent=11 // pred_fallthru
          _
        // Predicated region
        $region41: #{tpu_custom_call.1} parent=11 // pred_check
          %p349 = pneg %p219
        $region42: #{tpu_custom_call.1} parent=11 // pred_check_branch
          %351 = sbr.rel (%p349) target = $region44
        $region43: #{tpu_custom_call.1} parent=11 // pred_region
          %s353 = ssub.s32 16, 16
          %354 = vsyncadd [#allocation10], %s353
          %s356 = sshll.u32 [#allocation11], 4
          %s357 = int_to_ptr.vmem [resolvable:$true] %s356
          %359 = dma.hbm_to_vmem [thread:$0]  %s8, 16, %s357, [#allocation10]
        $region44: #{tpu_custom_call.1} parent=11 // pred_fallthru
          _
        // Predicated region
        $region45: #{tpu_custom_call.1} parent=11 // pred_check
          %p360 = pneg %p240
        $region46: #{tpu_custom_call.1} parent=11 // pred_check_branch
          %362 = sbr.rel (%p360) target = $region48
        $region47: #{tpu_custom_call.1} parent=11 // pred_region
          _
        $region48: #{tpu_custom_call.1} parent=11 // pred_fallthru
          _
        // Predicated region
        $region49: #{tpu_custom_call.1} parent=11 // pred_check
          %p363 = pneg %p261
        $region50: #{tpu_custom_call.1} parent=11 // pred_check_branch
          %365 = sbr.rel (%p363) target = $region52
        $region51: #{tpu_custom_call.1} parent=11 // pred_region
          _
        $region52: #{tpu_custom_call.1} parent=11 // pred_fallthru
          _
      $region12: #{tpu_custom_call.1} parent=5 // pred_fallthru
        _
      %p366 = scmp.lt.s32.totalorder %s25, 2
      // Predicated region
      $region53: #{tpu_custom_call.1} parent=5 // pred_check
        %p367 = pneg %p366
      $region54: #{tpu_custom_call.1} parent=5 // pred_check_branch
        %369 = sbr.rel (%p367) target = $region56
      $region55: #{tpu_custom_call.1} parent=5 // pred_region
        // Predicated region
        $region57: #{tpu_custom_call.1} parent=55 // pred_check
          %p370 = pneg %p45
        $region58: #{tpu_custom_call.1} parent=55 // pred_check_branch
          %372 = sbr.rel (%p370) target = $region60
        $region59: #{tpu_custom_call.1} parent=55 // pred_region
          %s373 = sand.u32 %s35, 1
          %s374 = scalar_lea.sflag [#allocation4], %s373
          %s375 = sand.u32 %s35, 1
          %s376 = smul.addr %s375, 128
          %s377 = scalar_lea.vmem [#allocation3], %s376
          %s378 = smul.u32 2, %s25
          %s380 = ssub.s32 2048, 2048
          %381 = vsyncadd %s374, %s380
          %s382 = smul.addr %s378, 8
          %s383 = smul.addr %s382, 128
          %s384 = scalar_lea.hbm %s0, %s383
          %s385 = sshll.u32 %s377, 4
          %s386 = int_to_ptr.vmem [resolvable:$true] %s385
          %391 = dma.hbm_to_vmem [thread:$0]  %s384, 2048, %s386, %s374, 128, 128, 8
        $region60: #{tpu_custom_call.1} parent=55 // pred_fallthru
          _
      $region56: #{tpu_custom_call.1} parent=5 // pred_fallthru
        _
      %p392 = scmp.le.s32.totalorder 1, %s25
      %p393 = scmp.lt.s32.totalorder %s25, 3
      %p394 = pnand %p392, %p393
      %p395 = pneg %p394
      // Predicated region
      $region61: #{tpu_custom_call.1} parent=5 // pred_check
        _
      $region62: #{tpu_custom_call.1} parent=5 // pred_check_branch
        %397 = sbr.rel (%p394) target = $region64
      $region63: #{tpu_custom_call.1} parent=5 // pred_region
        %s398 = ssub.s32 %s25, 1
        %s399 = sand.u32 %s38, 1
        %s400 = scalar_lea.sflag [#allocation4], %s399
        %s401 = sand.u32 %s38, 1
        %s402 = smul.addr %s401, 128
        %s403 = scalar_lea.vmem [#allocation3], %s402
        // Predicated region
        $region65: #{tpu_custom_call.1} parent=63 // pred_check
          %p404 = pneg %p51
        $region66: #{tpu_custom_call.1} parent=63 // pred_check_branch
          %406 = sbr.rel (%p404) target = $region68
        $region67: #{tpu_custom_call.1} parent=63 // pred_region
          %407 = dma.done %s400, 2048
        $region68: #{tpu_custom_call.1} parent=63 // pred_fallthru
          _
        // Predicated region
        $region69: #{tpu_custom_call.1} parent=63 // pred_check
          %p408 = pneg %p114
        $region70: #{tpu_custom_call.1} parent=63 // pred_check_branch
          %410 = sbr.rel (%p408) target = $region72
        $region71: #{tpu_custom_call.1} parent=63 // pred_region
          %411 = dma.done [#allocation7], 9216
        $region72: #{tpu_custom_call.1} parent=63 // pred_fallthru
          _
        // Predicated region
        $region73: #{tpu_custom_call.1} parent=63 // pred_check
          %p412 = pneg %p135
        $region74: #{tpu_custom_call.1} parent=63 // pred_check_branch
          %414 = sbr.rel (%p412) target = $region76
        $region75: #{tpu_custom_call.1} parent=63 // pred_region
          %415 = dma.done [#allocation7], 16
        $region76: #{tpu_custom_call.1} parent=63 // pred_fallthru
          _
        // Predicated region
        $region77: #{tpu_custom_call.1} parent=63 // pred_check
          %p416 = pneg %p177
        $region78: #{tpu_custom_call.1} parent=63 // pred_check_branch
          %418 = sbr.rel (%p416) target = $region80
        $region79: #{tpu_custom_call.1} parent=63 // pred_region
          %419 = dma.done [#allocation10], 16
        $region80: #{tpu_custom_call.1} parent=63 // pred_fallthru
          _
        // Predicated region
        $region81: #{tpu_custom_call.1} parent=63 // pred_check
          %p420 = pneg %p219
        $region82: #{tpu_custom_call.1} parent=63 // pred_check_branch
          %422 = sbr.rel (%p420) target = $region84
        $region83: #{tpu_custom_call.1} parent=63 // pred_region
          %423 = dma.done [#allocation10], 16
        $region84: #{tpu_custom_call.1} parent=63 // pred_fallthru
          _
        %s424 = sand.u32 %s38, 1
        %s425 = scalar_lea.sflag [#allocation4], %s424
        %s426 = sand.u32 %s38, 1
        %s427 = smul.addr %s426, 128
        %s428 = scalar_lea.vmem [#allocation3], %s427
        %p429 = pneg %p51
        %p430 = pneg %p48
        %p431 = pneg %p72
        %p432 = pneg %p69
        %p433 = pneg %p93
        %p434 = pneg %p90
        %p435 = pneg %p114
        %p436 = pneg %p111
        %p437 = pneg %p135
        %p438 = pneg %p132
        %p439 = pneg %p156
        %p440 = pneg %p153
        %p441 = pneg %p177
        %p442 = pneg %p174
        %p443 = pneg %p198
        %p444 = pneg %p195
        %p445 = pneg %p219
        %p446 = pneg %p216
        %p447 = pneg %p240
        %p448 = pneg %p237
        %p449 = pneg %p261
        %p450 = pneg %p258
        %p451 = pneg %p287
        %p452 = pneg %p284
        %s453 = sand.u32 %s274, 1
        %s454 = scalar_lea.sflag [#allocation5], %s453
        %s455 = sand.u32 %s274, 1
        %s456 = smul.addr %s455, 128
        %s457 = scalar_lea.vmem [#allocation12], %s456
        %s458 = smul.u32 2, %s30
        %s459 = smul.u32 2, %s30
        %v461 = vld [vmem:[%s403] sm:$0xff]
        %v462 = vld [vmem:[%s403 + $0x8] sm:$0xff]
        %v463 = vld [vmem:[%s403 + $0x10] sm:$0xff]
        %v464 = vld [vmem:[%s403 + $0x18] sm:$0xff]
        %v465 = vld [vmem:[%s403 + $0x20] sm:$0xff]
        %v466 = vld [vmem:[%s403 + $0x28] sm:$0xff]
        %v467 = vld [vmem:[%s403 + $0x30] sm:$0xff]
        %v468 = vld [vmem:[%s403 + $0x38] sm:$0xff]
        %v469 = vld [vmem:[%s403 + $0x40] sm:$0xff]
        %v470 = vld [vmem:[%s403 + $0x48] sm:$0xff]
        %v471 = vld [vmem:[%s403 + $0x50] sm:$0xff]
        %v472 = vld [vmem:[%s403 + $0x58] sm:$0xff]
        %v473 = vld [vmem:[%s403 + $0x60] sm:$0xff]
        %v474 = vld [vmem:[%s403 + $0x68] sm:$0xff]
        %v475 = vld [vmem:[%s403 + $0x70] sm:$0xff]
        %v476 = vld [vmem:[%s403 + $0x78] sm:$0xff]
        %v477 = vpack.c.bf16 %v462, %v461
        %v478 = vpack.c.bf16 %v464, %v463
        %v479 = vpack.c.bf16 %v466, %v465
        %v480 = vpack.c.bf16 %v468, %v467
        %v481 = vpack.c.bf16 %v470, %v469
        %v482 = vpack.c.bf16 %v472, %v471
        %v483 = vpack.c.bf16 %v474, %v473
        %v484 = vpack.c.bf16 %v476, %v475
        %v485 = vld [vmem:[%s1] sm:$0xff]
        %v486 = vld [vmem:[%s1 + $0x8] sm:$0xff]
        %v487 = vld [vmem:[%s1 + $0x10] sm:$0xff]
        %v488 = vld [vmem:[%s1 + $0x18] sm:$0xff]
        %v489 = vld [vmem:[%s2] sm:$0x3]
        %v491 = vlaneseq
        %v492 = vshrl.u32 %v491, 7
        %v493 = vsub.s32 0, %v492
        %v494 = vrot.slane %v489, %v493
        %v495 = vlaneseq
        %v496 = vshrl.u32 %v495, 7
        %v497 = vsub.s32 1, %v496
        %v498 = vrot.slane %v489, %v497
        %v505 = vunpack.c.l.b16 %v485
        %v506 = vunpack.c.h.b16 %v485
        %v507 = vunpack.c.l.b16 %v486
        %v508 = vunpack.c.h.b16 %v486
        %v509 = vunpack.c.l.b16 %v487
        %v510 = vunpack.c.h.b16 %v487
        %v511 = vunpack.c.l.b16 %v488
        %v512 = vunpack.c.h.b16 %v488
        %v513 = vpack.c.b16 %v507, %v505
        %v514 = vpack.c.b16 %v508, %v506
        %v515 = vpack.c.b16 %v511, %v509
        %v516 = vpack.c.b16 %v512, %v510
        %vm521 = vcmask 261120
        %v523 = vsel %vm521, %v477, 0
        %v526 = vsel %vm521, %v478, 0
        %v529 = vsel %vm521, %v479, 0
        %v532 = vsel %vm521, %v480, 0
        %v535 = vsel %vm521, %v481, 0
        %v538 = vsel %vm521, %v482, 0
        %v541 = vsel %vm521, %v483, 0
        %v544 = vsel %vm521, %v484, 0
        %546 = vmatprep.subr.bf16.mxu0 %v514
        %547 = vmatpush1.bf16.msra.mxu0 %v513
        %548 = vmatprep.subr.bf16.mxu0 %v516
        %549 = vmatpush1.bf16.msra.mxu0 %v515
        %550 = vmatprep.subr.bf16.mxu0 0
        %551 = vmatpush1.bf16.msra.mxu0 0
        %552 = vmatprep.subr.bf16.mxu0 0
        %553 = vmatpush1.bf16.msra.mxu0 0
        %554 = vmatprep.subr.bf16.mxu0 0
        %555 = vmatpush1.bf16.msra.mxu0 0
        %556 = vmatprep.subr.bf16.mxu0 0
        %557 = vmatpush1.bf16.msra.mxu0 0
        %558 = vmatprep.subr.bf16.mxu0 0
        %559 = vmatpush1.bf16.msra.mxu0 0
        %560 = vmatprep.subr.bf16.mxu0 0
        %561 = vmatpush1.bf16.msra.mxu0 0
        %562 = vmatprep.subr.bf16.mxu0 0
        %563 = vmatpush1.bf16.msra.mxu0 0
        %564 = vmatprep.subr.bf16.mxu0 0
        %565 = vmatpush1.bf16.msra.mxu0 0
        %566 = vmatprep.subr.bf16.mxu0 0
        %567 = vmatpush1.bf16.msra.mxu0 0
        %568 = vmatprep.subr.bf16.mxu0 0
        %569 = vmatpush1.bf16.msra.mxu0 0
        %570 = vmatprep.subr.bf16.mxu0 0
        %571 = vmatpush1.bf16.msra.mxu0 0
        %572 = vmatprep.subr.bf16.mxu0 0
        %573 = vmatpush1.bf16.msra.mxu0 0
        %574 = vmatprep.subr.bf16.mxu0 0
        %575 = vmatpush1.bf16.msra.mxu0 0
        %576 = vmatprep.subr.bf16.mxu0 0
        %577 = vmatpush1.bf16.msra.mxu0 0
        %578 = vmatprep.mubr.bf16.mxu0 0
        %579 = vmatmul.mubr.bf16.gmra.mrb[0].mxu0 %v523
        %v580 = vpop.f32.mrb[0].mxu0
        %v581 = vadd.f32 %v494, %v580
        %v582 = vpop.f32.mrb[0].mxu0
        %v583 = vadd.f32 %v498, %v582
        %v584 = vpop.f32.mrb[0].mxu0
        %v585 = vadd.f32 %v494, %v584
        %v586 = vpop.f32.mrb[0].mxu0
        %v587 = vadd.f32 %v498, %v586
        %588 = vmatprep.mubr.bf16.mxu0 0
        %589 = vmatmul.mubr.bf16.gmra.mrb[0].mxu0 %v526
        %v590 = vpop.f32.mrb[0].mxu0
        %v591 = vadd.f32 %v494, %v590
        %v592 = vpop.f32.mrb[0].mxu0
        %v593 = vadd.f32 %v498, %v592
        %v594 = vpop.f32.mrb[0].mxu0
        %v595 = vadd.f32 %v494, %v594
        %v596 = vpop.f32.mrb[0].mxu0
        %v597 = vadd.f32 %v498, %v596
        %598 = vmatprep.mubr.bf16.mxu0 0
        %599 = vmatmul.mubr.bf16.gmra.mrb[0].mxu0 %v529
        %v600 = vpop.f32.mrb[0].mxu0
        %v601 = vadd.f32 %v494, %v600
        %v602 = vpop.f32.mrb[0].mxu0
        %v603 = vadd.f32 %v498, %v602
        %v604 = vpop.f32.mrb[0].mxu0
        %v605 = vadd.f32 %v494, %v604
        %v606 = vpop.f32.mrb[0].mxu0
        %v607 = vadd.f32 %v498, %v606
        %608 = vmatprep.mubr.bf16.mxu0 0
        %609 = vmatmul.mubr.bf16.gmra.mrb[0].mxu0 %v532
        %v610 = vpop.f32.mrb[0].mxu0
        %v611 = vadd.f32 %v494, %v610
        %v612 = vpop.f32.mrb[0].mxu0
        %v613 = vadd.f32 %v498, %v612
        %v614 = vpop.f32.mrb[0].mxu0
        %v615 = vadd.f32 %v494, %v614
        %v616 = vpop.f32.mrb[0].mxu0
        %v617 = vadd.f32 %v498, %v616
        %618 = vmatprep.mubr.bf16.mxu0 0
        %619 = vmatmul.mubr.bf16.gmra.mrb[0].mxu0 %v535
        %v620 = vpop.f32.mrb[0].mxu0
        %v621 = vadd.f32 %v494, %v620
        %v622 = vpop.f32.mrb[0].mxu0
        %v623 = vadd.f32 %v498, %v622
        %v624 = vpop.f32.mrb[0].mxu0
        %v625 = vadd.f32 %v494, %v624
        %v626 = vpop.f32.mrb[0].mxu0
        %v627 = vadd.f32 %v498, %v626
        %628 = vmatprep.mubr.bf16.mxu0 0
        %629 = vmatmul.mubr.bf16.gmra.mrb[0].mxu0 %v538
        %v630 = vpop.f32.mrb[0].mxu0
        %v631 = vadd.f32 %v494, %v630
        %v632 = vpop.f32.mrb[0].mxu0
        %v633 = vadd.f32 %v498, %v632
        %v634 = vpop.f32.mrb[0].mxu0
        %v635 = vadd.f32 %v494, %v634
        %v636 = vpop.f32.mrb[0].mxu0
        %v637 = vadd.f32 %v498, %v636
        %638 = vmatprep.mubr.bf16.mxu0 0
        %639 = vmatmul.mubr.bf16.gmra.mrb[0].mxu0 %v541
        %v640 = vpop.f32.mrb[0].mxu0
        %v641 = vadd.f32 %v494, %v640
        %v642 = vpop.f32.mrb[0].mxu0
        %v643 = vadd.f32 %v498, %v642
        %v644 = vpop.f32.mrb[0].mxu0
        %v645 = vadd.f32 %v494, %v644
        %v646 = vpop.f32.mrb[0].mxu0
        %v647 = vadd.f32 %v498, %v646
        %648 = vmatprep.mubr.bf16.mxu0 0
        %649 = vmatmul.mubr.bf16.gmra.mrb[0].mxu0 %v544
        %v650 = vpop.f32.mrb[0].mxu0
        %v651 = vadd.f32 %v494, %v650
        %v652 = vpop.f32.mrb[0].mxu0
        %v653 = vadd.f32 %v498, %v652
        %v654 = vpop.f32.mrb[0].mxu0
        %v655 = vadd.f32 %v494, %v654
        %v656 = vpop.f32.mrb[0].mxu0
        %v657 = vadd.f32 %v498, %v656
        %658 = vdwg.mxu0
        %v659 = vmul.f32 %v583, 0.5
        %v660 = vmul.f32 %v587, 0.5
        %v661 = vmul.f32 %v593, 0.5
        %v662 = vmul.f32 %v597, 0.5
        %v663 = vmul.f32 %v603, 0.5
        %v664 = vmul.f32 %v607, 0.5
        %v665 = vmul.f32 %v613, 0.5
        %v666 = vmul.f32 %v617, 0.5
        %v667 = vmul.f32 %v623, 0.5
        %v668 = vmul.f32 %v627, 0.5
        %v669 = vmul.f32 %v633, 0.5
        %v670 = vmul.f32 %v637, 0.5
        %v671 = vmul.f32 %v643, 0.5
        %v672 = vmul.f32 %v647, 0.5
        %v673 = vmul.f32 %v653, 0.5
        %v674 = vmul.f32 %v657, 0.5
        %v675 = vmul.f32 %v583, 0.70710677
        %v676 = vmul.f32 %v587, 0.70710677
        %v677 = vmul.f32 %v593, 0.70710677
        %v678 = vmul.f32 %v597, 0.70710677
        %v679 = vmul.f32 %v603, 0.70710677
        %v680 = vmul.f32 %v607, 0.70710677
        %v681 = vmul.f32 %v613, 0.70710677
        %v682 = vmul.f32 %v617, 0.70710677
        %v683 = vmul.f32 %v623, 0.70710677
        %v684 = vmul.f32 %v627, 0.70710677
        %v685 = vmul.f32 %v633, 0.70710677
        %v686 = vmul.f32 %v637, 0.70710677
        %v687 = vmul.f32 %v643, 0.70710677
        %v688 = vmul.f32 %v647, 0.70710677
        %v689 = vmul.f32 %v653, 0.70710677
        %v690 = vmul.f32 %v657, 0.70710677
        %v691 = verf.f32.pop %v675
        %v692 = verf.f32.pop %v676
        %v693 = verf.f32.pop %v677
        %v694 = verf.f32.pop %v678
        %v695 = verf.f32.pop %v679
        %v696 = verf.f32.pop %v680
        %v697 = verf.f32.pop %v681
        %v698 = verf.f32.pop %v682
        %v699 = verf.f32.pop %v683
        %v700 = verf.f32.pop %v684
        %v701 = verf.f32.pop %v685
        %v702 = verf.f32.pop %v686
        %v703 = verf.f32.pop %v687
        %v704 = verf.f32.pop %v688
        %v705 = verf.f32.pop %v689
        %v706 = verf.f32.pop %v690
        %v707 = vadd.f32 %v691, 1.0
        %v708 = vadd.f32 %v692, 1.0
        %v709 = vadd.f32 %v693, 1.0
        %v710 = vadd.f32 %v694, 1.0
        %v711 = vadd.f32 %v695, 1.0
        %v712 = vadd.f32 %v696, 1.0
        %v713 = vadd.f32 %v697, 1.0
        %v714 = vadd.f32 %v698, 1.0
        %v715 = vadd.f32 %v699, 1.0
        %v716 = vadd.f32 %v700, 1.0
        %v717 = vadd.f32 %v701, 1.0
        %v718 = vadd.f32 %v702, 1.0
        %v719 = vadd.f32 %v703, 1.0
        %v720 = vadd.f32 %v704, 1.0
        %v721 = vadd.f32 %v705, 1.0
        %v722 = vadd.f32 %v706, 1.0
        %v723 = vmul.f32 %v659, %v707
        %v724 = vmul.f32 %v660, %v708
        %v725 = vmul.f32 %v661, %v709
        %v726 = vmul.f32 %v662, %v710
        %v727 = vmul.f32 %v663, %v711
        %v728 = vmul.f32 %v664, %v712
        %v729 = vmul.f32 %v665, %v713
        %v730 = vmul.f32 %v666, %v714
        %v731 = vmul.f32 %v667, %v715
        %v732 = vmul.f32 %v668, %v716
        %v733 = vmul.f32 %v669, %v717
        %v734 = vmul.f32 %v670, %v718
        %v735 = vmul.f32 %v671, %v719
        %v736 = vmul.f32 %v672, %v720
        %v737 = vmul.f32 %v673, %v721
        %v738 = vmul.f32 %v674, %v722
        %739 = vst [vmem:[#allocation2] sm:$0xff] 0.0
        %740 = vst [vmem:[#allocation2 + $0x8] sm:$0x3] 0.0
        %741 = vst [vmem:[#allocation2 + $0xa0] sm:$0xff] 0.0
        %742 = vst [vmem:[#allocation2 + $0xa8] sm:$0x3] 0.0
        %s743 = scalar_lea.vmem [#allocation2], 144
        %744 = vst [vmem:[%s743] sm:$0xff] 0.0
        %745 = vst [vmem:[%s743 + $0x8] sm:$0x3] 0.0
        %746 = vst [vmem:[%s743 + $0xa0] sm:$0xff] 0.0
        %747 = vst [vmem:[%s743 + $0xa8] sm:$0x3] 0.0
        %s748 = scalar_lea.vmem [#allocation2], 16
        %749 = vst [vmem:[%s748] sm:$0x1] 0.0
        %750 = vst [vmem:[%s748 + $0x10] sm:$0x1] 0.0
        %751 = vst [vmem:[%s748 + $0x20] sm:$0x1] 0.0
        %752 = vst [vmem:[%s748 + $0x30] sm:$0x1] 0.0
        %753 = vst [vmem:[%s748 + $0x40] sm:$0x1] 0.0
        %754 = vst [vmem:[%s748 + $0x50] sm:$0x1] 0.0
        %755 = vst [vmem:[%s748 + $0x60] sm:$0x1] 0.0
        %756 = vst [vmem:[%s748 + $0x70] sm:$0x1] 0.0
        %757 = vst [vmem:[%s748 + $0xa0] sm:$0x1] 0.0
        %758 = vst [vmem:[%s748 + $0xb0] sm:$0x1] 0.0
        %759 = vst [vmem:[%s748 + $0xc0] sm:$0x1] 0.0
        %760 = vst [vmem:[%s748 + $0xd0] sm:$0x1] 0.0
        %761 = vst [vmem:[%s748 + $0xe0] sm:$0x1] 0.0
        %762 = vst [vmem:[%s748 + $0xf0] sm:$0x1] 0.0
        %763 = vst [vmem:[%s748 + $0x100] sm:$0x1] 0.0
        %764 = vst [vmem:[%s748 + $0x110] sm:$0x1] 0.0
        %765 = vst [vmem:[%s748 + $0x9] sm:$0x1] 0.0
        %766 = vst [vmem:[%s748 + $0x19] sm:$0x1] 0.0
        %767 = vst [vmem:[%s748 + $0x29] sm:$0x1] 0.0
        %768 = vst [vmem:[%s748 + $0x39] sm:$0x1] 0.0
        %769 = vst [vmem:[%s748 + $0x49] sm:$0x1] 0.0
        %770 = vst [vmem:[%s748 + $0x59] sm:$0x1] 0.0
        %771 = vst [vmem:[%s748 + $0x69] sm:$0x1] 0.0
        %772 = vst [vmem:[%s748 + $0x79] sm:$0x1] 0.0
        %773 = vst [vmem:[%s748 + $0xa9] sm:$0x1] 0.0
        %774 = vst [vmem:[%s748 + $0xb9] sm:$0x1] 0.0
        %775 = vst [vmem:[%s748 + $0xc9] sm:$0x1] 0.0
        %776 = vst [vmem:[%s748 + $0xd9] sm:$0x1] 0.0
        %777 = vst [vmem:[%s748 + $0xe9] sm:$0x1] 0.0
        %778 = vst [vmem:[%s748 + $0xf9] sm:$0x1] 0.0
        %779 = vst [vmem:[%s748 + $0x109] sm:$0x1] 0.0
        %780 = vst [vmem:[%s748 + $0x119] sm:$0x1] 0.0
        %781 = vst [vmem:[%s748 + $0x1] sm:$0xff] %v723
        %782 = vst [vmem:[%s748 + $0x11] sm:$0xff] %v724
        %783 = vst [vmem:[%s748 + $0x21] sm:$0xff] %v725
        %784 = vst [vmem:[%s748 + $0x31] sm:$0xff] %v726
        %785 = vst [vmem:[%s748 + $0x41] sm:$0xff] %v727
        %786 = vst [vmem:[%s748 + $0x51] sm:$0xff] %v728
        %787 = vst [vmem:[%s748 + $0x61] sm:$0xff] %v729
        %788 = vst [vmem:[%s748 + $0x71] sm:$0xff] %v730
        %789 = vst [vmem:[%s748 + $0xa1] sm:$0xff] %v731
        %790 = vst [vmem:[%s748 + $0xb1] sm:$0xff] %v732
        %791 = vst [vmem:[%s748 + $0xc1] sm:$0xff] %v733
        %792 = vst [vmem:[%s748 + $0xd1] sm:$0xff] %v734
        %793 = vst [vmem:[%s748 + $0xe1] sm:$0xff] %v735
        %794 = vst [vmem:[%s748 + $0xf1] sm:$0xff] %v736
        %795 = vst [vmem:[%s748 + $0x101] sm:$0xff] %v737
        %796 = vst [vmem:[%s748 + $0x111] sm:$0xff] %v738
        %v797 = vld [vmem:[#allocation2] sm:$0xff]
        %v798 = vld [vmem:[#allocation2 + $0x10] sm:$0xff]
        %v799 = vld [vmem:[#allocation2 + $0x20] sm:$0xff]
        %v800 = vld [vmem:[#allocation2 + $0x30] sm:$0xff]
        %v801 = vld [vmem:[#allocation2 + $0x40] sm:$0xff]
        %v802 = vld [vmem:[#allocation2 + $0x50] sm:$0xff]
        %v803 = vld [vmem:[#allocation2 + $0x60] sm:$0xff]
        %v804 = vld [vmem:[#allocation2 + $0x70] sm:$0xff]
        %v805 = vld [vmem:[#allocation2 + $0xa0] sm:$0xff]
        %v806 = vld [vmem:[#allocation2 + $0xb0] sm:$0xff]
        %v807 = vld [vmem:[#allocation2 + $0xc0] sm:$0xff]
        %v808 = vld [vmem:[#allocation2 + $0xd0] sm:$0xff]
        %v809 = vld [vmem:[#allocation2 + $0xe0] sm:$0xff]
        %v810 = vld [vmem:[#allocation2 + $0xf0] sm:$0xff]
        %v811 = vld [vmem:[#allocation2 + $0x100] sm:$0xff]
        %v812 = vld [vmem:[#allocation2 + $0x110] sm:$0xff]
        %v813 = vpack.c.bf16 %v798, %v797
        %v814 = vpack.c.bf16 %v800, %v799
        %v815 = vpack.c.bf16 %v802, %v801
        %v816 = vpack.c.bf16 %v804, %v803
        %v817 = vpack.c.bf16 %v806, %v805
        %v818 = vpack.c.bf16 %v808, %v807
        %v819 = vpack.c.bf16 %v810, %v809
        %v820 = vpack.c.bf16 %v812, %v811
        %v821 = vld [vmem:[#allocation2 + $0x1] sm:$0xff]
        %v822 = vld [vmem:[#allocation2 + $0x11] sm:$0xff]
        %v823 = vld [vmem:[#allocation2 + $0x21] sm:$0xff]
        %v824 = vld [vmem:[#allocation2 + $0x31] sm:$0xff]
        %v825 = vld [vmem:[#allocation2 + $0x41] sm:$0xff]
        %v826 = vld [vmem:[#allocation2 + $0x51] sm:$0xff]
        %v827 = vld [vmem:[#allocation2 + $0x61] sm:$0xff]
        %v828 = vld [vmem:[#allocation2 + $0x71] sm:$0xff]
        %v829 = vld [vmem:[#allocation2 + $0xa1] sm:$0xff]
        %v830 = vld [vmem:[#allocation2 + $0xb1] sm:$0xff]
        %v831 = vld [vmem:[#allocation2 + $0xc1] sm:$0xff]
        %v832 = vld [vmem:[#allocation2 + $0xd1] sm:$0xff]
        %v833 = vld [vmem:[#allocation2 + $0xe1] sm:$0xff]
        %v834 = vld [vmem:[#allocation2 + $0xf1] sm:$0xff]
        %v835 = vld [vmem:[#allocation2 + $0x101] sm:$0xff]
        %v836 = vld [vmem:[#allocation2 + $0x111] sm:$0xff]
        %v837 = vpack.c.bf16 %v822, %v821
        %v838 = vpack.c.bf16 %v824, %v823
        %v839 = vpack.c.bf16 %v826, %v825
        %v840 = vpack.c.bf16 %v828, %v827
        %v841 = vpack.c.bf16 %v830, %v829
        %v842 = vpack.c.bf16 %v832, %v831
        %v843 = vpack.c.bf16 %v834, %v833
        %v844 = vpack.c.bf16 %v836, %v835
        %v845 = vld [vmem:[#allocation2 + $0x2] sm:$0xff]
        %v846 = vld [vmem:[#allocation2 + $0x12] sm:$0xff]
        %v847 = vld [vmem:[#allocation2 + $0x22] sm:$0xff]
        %v848 = vld [vmem:[#allocation2 + $0x32] sm:$0xff]
        %v849 = vld [vmem:[#allocation2 + $0x42] sm:$0xff]
        %v850 = vld [vmem:[#allocation2 + $0x52] sm:$0xff]
        %v851 = vld [vmem:[#allocation2 + $0x62] sm:$0xff]
        %v852 = vld [vmem:[#allocation2 + $0x72] sm:$0xff]
        %v853 = vld [vmem:[#allocation2 + $0xa2] sm:$0xff]
        %v854 = vld [vmem:[#allocation2 + $0xb2] sm:$0xff]
        %v855 = vld [vmem:[#allocation2 + $0xc2] sm:$0xff]
        %v856 = vld [vmem:[#allocation2 + $0xd2] sm:$0xff]
        %v857 = vld [vmem:[#allocation2 + $0xe2] sm:$0xff]
        %v858 = vld [vmem:[#allocation2 + $0xf2] sm:$0xff]
        %v859 = vld [vmem:[#allocation2 + $0x102] sm:$0xff]
        %v860 = vld [vmem:[#allocation2 + $0x112] sm:$0xff]
        %v861 = vpack.c.bf16 %v846, %v845
        %v862 = vpack.c.bf16 %v848, %v847
        %v863 = vpack.c.bf16 %v850, %v849
        %v864 = vpack.c.bf16 %v852, %v851
        %v865 = vpack.c.bf16 %v854, %v853
        %v866 = vpack.c.bf16 %v856, %v855
        %v867 = vpack.c.bf16 %v858, %v857
        %v868 = vpack.c.bf16 %v860, %v859
        %v869 = vld [vmem:[%s748] sm:$0xff]
        %v870 = vld [vmem:[%s748 + $0x10] sm:$0xff]
        %v871 = vld [vmem:[%s748 + $0x20] sm:$0xff]
        %v872 = vld [vmem:[%s748 + $0x30] sm:$0xff]
        %v873 = vld [vmem:[%s748 + $0x40] sm:$0xff]
        %v874 = vld [vmem:[%s748 + $0x50] sm:$0xff]
        %v875 = vld [vmem:[%s748 + $0x60] sm:$0xff]
        %v876 = vld [vmem:[%s748 + $0x70] sm:$0xff]
        %v877 = vld [vmem:[%s748 + $0xa0] sm:$0xff]
        %v878 = vld [vmem:[%s748 + $0xb0] sm:$0xff]
        %v879 = vld [vmem:[%s748 + $0xc0] sm:$0xff]
        %v880 = vld [vmem:[%s748 + $0xd0] sm:$0xff]
        %v881 = vld [vmem:[%s748 + $0xe0] sm:$0xff]
        %v882 = vld [vmem:[%s748 + $0xf0] sm:$0xff]
        %v883 = vld [vmem:[%s748 + $0x100] sm:$0xff]
        %v884 = vld [vmem:[%s748 + $0x110] sm:$0xff]
        %v885 = vpack.c.bf16 %v870, %v869
        %v886 = vpack.c.bf16 %v872, %v871
        %v887 = vpack.c.bf16 %v874, %v873
        %v888 = vpack.c.bf16 %v876, %v875
        %v889 = vpack.c.bf16 %v878, %v877
        %v890 = vpack.c.bf16 %v880, %v879
        %v891 = vpack.c.bf16 %v882, %v881
        %v892 = vpack.c.bf16 %v884, %v883
        %v893 = vld [vmem:[%s748 + $0x1] sm:$0xff]
        %v894 = vld [vmem:[%s748 + $0x11] sm:$0xff]
        %v895 = vld [vmem:[%s748 + $0x21] sm:$0xff]
        %v896 = vld [vmem:[%s748 + $0x31] sm:$0xff]
        %v897 = vld [vmem:[%s748 + $0x41] sm:$0xff]
        %v898 = vld [vmem:[%s748 + $0x51] sm:$0xff]
        %v899 = vld [vmem:[%s748 + $0x61] sm:$0xff]
        %v900 = vld [vmem:[%s748 + $0x71] sm:$0xff]
        %v901 = vld [vmem:[%s748 + $0xa1] sm:$0xff]
        %v902 = vld [vmem:[%s748 + $0xb1] sm:$0xff]
        %v903 = vld [vmem:[%s748 + $0xc1] sm:$0xff]
        %v904 = vld [vmem:[%s748 + $0xd1] sm:$0xff]
        %v905 = vld [vmem:[%s748 + $0xe1] sm:$0xff]
        %v906 = vld [vmem:[%s748 + $0xf1] sm:$0xff]
        %v907 = vld [vmem:[%s748 + $0x101] sm:$0xff]
        %v908 = vld [vmem:[%s748 + $0x111] sm:$0xff]
        %v909 = vpack.c.bf16 %v894, %v893
        %v910 = vpack.c.bf16 %v896, %v895
        %v911 = vpack.c.bf16 %v898, %v897
        %v912 = vpack.c.bf16 %v900, %v899
        %v913 = vpack.c.bf16 %v902, %v901
        %v914 = vpack.c.bf16 %v904, %v903
        %v915 = vpack.c.bf16 %v906, %v905
        %v916 = vpack.c.bf16 %v908, %v907
        %v917 = vld [vmem:[%s748 + $0x2] sm:$0xff]
        %v918 = vld [vmem:[%s748 + $0x12] sm:$0xff]
        %v919 = vld [vmem:[%s748 + $0x22] sm:$0xff]
        %v920 = vld [vmem:[%s748 + $0x32] sm:$0xff]
        %v921 = vld [vmem:[%s748 + $0x42] sm:$0xff]
        %v922 = vld [vmem:[%s748 + $0x52] sm:$0xff]
        %v923 = vld [vmem:[%s748 + $0x62] sm:$0xff]
        %v924 = vld [vmem:[%s748 + $0x72] sm:$0xff]
        %v925 = vld [vmem:[%s748 + $0xa2] sm:$0xff]
        %v926 = vld [vmem:[%s748 + $0xb2] sm:$0xff]
        %v927 = vld [vmem:[%s748 + $0xc2] sm:$0xff]
        %v928 = vld [vmem:[%s748 + $0xd2] sm:$0xff]
        %v929 = vld [vmem:[%s748 + $0xe2] sm:$0xff]
        %v930 = vld [vmem:[%s748 + $0xf2] sm:$0xff]
        %v931 = vld [vmem:[%s748 + $0x102] sm:$0xff]
        %v932 = vld [vmem:[%s748 + $0x112] sm:$0xff]
        %v933 = vpack.c.bf16 %v918, %v917
        %v934 = vpack.c.bf16 %v920, %v919
        %v935 = vpack.c.bf16 %v922, %v921
        %v936 = vpack.c.bf16 %v924, %v923
        %v937 = vpack.c.bf16 %v926, %v925
        %v938 = vpack.c.bf16 %v928, %v927
        %v939 = vpack.c.bf16 %v930, %v929
        %v940 = vpack.c.bf16 %v932, %v931
        %s941 = scalar_lea.vmem [#allocation2], 32
        %v942 = vld [vmem:[%s941] sm:$0xff]
        %v943 = vld [vmem:[%s941 + $0x10] sm:$0xff]
        %v944 = vld [vmem:[%s941 + $0x20] sm:$0xff]
        %v945 = vld [vmem:[%s941 + $0x30] sm:$0xff]
        %v946 = vld [vmem:[%s941 + $0x40] sm:$0xff]
        %v947 = vld [vmem:[%s941 + $0x50] sm:$0xff]
        %v948 = vld [vmem:[%s941 + $0x60] sm:$0xff]
        %v949 = vld [vmem:[%s941 + $0x70] sm:$0xff]
        %v950 = vld [vmem:[%s941 + $0xa0] sm:$0xff]
        %v951 = vld [vmem:[%s941 + $0xb0] sm:$0xff]
        %v952 = vld [vmem:[%s941 + $0xc0] sm:$0xff]
        %v953 = vld [vmem:[%s941 + $0xd0] sm:$0xff]
        %v954 = vld [vmem:[%s941 + $0xe0] sm:$0xff]
        %v955 = vld [vmem:[%s941 + $0xf0] sm:$0xff]
        %v956 = vld [vmem:[%s941 + $0x100] sm:$0xff]
        %v957 = vld [vmem:[%s941 + $0x110] sm:$0xff]
        %v958 = vpack.c.bf16 %v943, %v942
        %v959 = vpack.c.bf16 %v945, %v944
        %v960 = vpack.c.bf16 %v947, %v946
        %v961 = vpack.c.bf16 %v949, %v948
        %v962 = vpack.c.bf16 %v951, %v950
        %v963 = vpack.c.bf16 %v953, %v952
        %v964 = vpack.c.bf16 %v955, %v954
        %v965 = vpack.c.bf16 %v957, %v956
        %v966 = vld [vmem:[%s941 + $0x1] sm:$0xff]
        %v967 = vld [vmem:[%s941 + $0x11] sm:$0xff]
        %v968 = vld [vmem:[%s941 + $0x21] sm:$0xff]
        %v969 = vld [vmem:[%s941 + $0x31] sm:$0xff]
        %v970 = vld [vmem:[%s941 + $0x41] sm:$0xff]
        %v971 = vld [vmem:[%s941 + $0x51] sm:$0xff]
        %v972 = vld [vmem:[%s941 + $0x61] sm:$0xff]
        %v973 = vld [vmem:[%s941 + $0x71] sm:$0xff]
        %v974 = vld [vmem:[%s941 + $0xa1] sm:$0xff]
        %v975 = vld [vmem:[%s941 + $0xb1] sm:$0xff]
        %v976 = vld [vmem:[%s941 + $0xc1] sm:$0xff]
        %v977 = vld [vmem:[%s941 + $0xd1] sm:$0xff]
        %v978 = vld [vmem:[%s941 + $0xe1] sm:$0xff]
        %v979 = vld [vmem:[%s941 + $0xf1] sm:$0xff]
        %v980 = vld [vmem:[%s941 + $0x101] sm:$0xff]
        %v981 = vld [vmem:[%s941 + $0x111] sm:$0xff]
        %v982 = vpack.c.bf16 %v967, %v966
        %v983 = vpack.c.bf16 %v969, %v968
        %v984 = vpack.c.bf16 %v971, %v970
        %v985 = vpack.c.bf16 %v973, %v972
        %v986 = vpack.c.bf16 %v975, %v974
        %v987 = vpack.c.bf16 %v977, %v976
        %v988 = vpack.c.bf16 %v979, %v978
        %v989 = vpack.c.bf16 %v981, %v980
        %v990 = vld [vmem:[%s941 + $0x2] sm:$0xff]
        %v991 = vld [vmem:[%s941 + $0x12] sm:$0xff]
        %v992 = vld [vmem:[%s941 + $0x22] sm:$0xff]
        %v993 = vld [vmem:[%s941 + $0x32] sm:$0xff]
        %v994 = vld [vmem:[%s941 + $0x42] sm:$0xff]
        %v995 = vld [vmem:[%s941 + $0x52] sm:$0xff]
        %v996 = vld [vmem:[%s941 + $0x62] sm:$0xff]
        %v997 = vld [vmem:[%s941 + $0x72] sm:$0xff]
        %v998 = vld [vmem:[%s941 + $0xa2] sm:$0xff]
        %v999 = vld [vmem:[%s941 + $0xb2] sm:$0xff]
        %v1000 = vld [vmem:[%s941 + $0xc2] sm:$0xff]
        %v1001 = vld [vmem:[%s941 + $0xd2] sm:$0xff]
        %v1002 = vld [vmem:[%s941 + $0xe2] sm:$0xff]
        %v1003 = vld [vmem:[%s941 + $0xf2] sm:$0xff]
        %v1004 = vld [vmem:[%s941 + $0x102] sm:$0xff]
        %v1005 = vld [vmem:[%s941 + $0x112] sm:$0xff]
        %v1006 = vpack.c.bf16 %v991, %v990
        %v1007 = vpack.c.bf16 %v993, %v992
        %v1008 = vpack.c.bf16 %v995, %v994
        %v1009 = vpack.c.bf16 %v997, %v996
        %v1010 = vpack.c.bf16 %v999, %v998
        %v1011 = vpack.c.bf16 %v1001, %v1000
        %v1012 = vpack.c.bf16 %v1003, %v1002
        %v1013 = vpack.c.bf16 %v1005, %v1004
        %v1014 = vld [vmem:[#allocation6] sm:$0xf]
        %v1015 = vld [vmem:[#allocation6 + $0x4] sm:$0xf]
        %v1016 = vld [vmem:[#allocation6 + $0x8] sm:$0xf]
        %v1017 = vld [vmem:[#allocation6 + $0xc] sm:$0xf]
        %v1018 = vld [vmem:[#allocation6 + $0x10] sm:$0xf]
        %v1019 = vld [vmem:[#allocation6 + $0x14] sm:$0xf]
        %v1020 = vld [vmem:[#allocation6 + $0x18] sm:$0xf]
        %v1021 = vld [vmem:[#allocation6 + $0x1c] sm:$0xf]
        %v1022 = vld [vmem:[#allocation6 + $0x20] sm:$0xf]
        %v1023 = vld [vmem:[#allocation6 + $0x24] sm:$0xf]
        %v1024 = vld [vmem:[#allocation6 + $0x28] sm:$0xf]
        %v1025 = vld [vmem:[#allocation6 + $0x2c] sm:$0xf]
        %v1026 = vld [vmem:[#allocation6 + $0x30] sm:$0xf]
        %v1027 = vld [vmem:[#allocation6 + $0x34] sm:$0xf]
        %v1028 = vld [vmem:[#allocation6 + $0x38] sm:$0xf]
        %v1029 = vld [vmem:[#allocation6 + $0x3c] sm:$0xf]
        %v1030 = vld [vmem:[#allocation6 + $0x40] sm:$0xf]
        %v1031 = vld [vmem:[#allocation6 + $0x44] sm:$0xf]
        %v1032 = vld [vmem:[#allocation6 + $0x48] sm:$0xf]
        %v1033 = vld [vmem:[#allocation6 + $0x4c] sm:$0xf]
        %v1034 = vld [vmem:[#allocation6 + $0x50] sm:$0xf]
        %v1035 = vld [vmem:[#allocation6 + $0x54] sm:$0xf]
        %v1036 = vld [vmem:[#allocation6 + $0x58] sm:$0xf]
        %v1037 = vld [vmem:[#allocation6 + $0x5c] sm:$0xf]
        %v1038 = vld [vmem:[#allocation6 + $0x60] sm:$0xf]
        %v1039 = vld [vmem:[#allocation6 + $0x64] sm:$0xf]
        %v1040 = vld [vmem:[#allocation6 + $0x68] sm:$0xf]
        %v1041 = vld [vmem:[#allocation6 + $0x6c] sm:$0xf]
        %v1042 = vld [vmem:[#allocation6 + $0x70] sm:$0xf]
        %v1043 = vld [vmem:[#allocation6 + $0x74] sm:$0xf]
        %v1044 = vld [vmem:[#allocation6 + $0x78] sm:$0xf]
        %v1045 = vld [vmem:[#allocation6 + $0x7c] sm:$0xf]
        %v1046 = vld [vmem:[#allocation6 + $0x80] sm:$0xf]
        %v1047 = vld [vmem:[#allocation6 + $0x84] sm:$0xf]
        %v1048 = vld [vmem:[#allocation6 + $0x88] sm:$0xf]
        %v1049 = vld [vmem:[#allocation6 + $0x8c] sm:$0xf]
        %v1050 = vld [vmem:[#allocation6 + $0x90] sm:$0xf]
        %v1051 = vld [vmem:[#allocation6 + $0x94] sm:$0xf]
        %v1052 = vld [vmem:[#allocation6 + $0x98] sm:$0xf]
        %v1053 = vld [vmem:[#allocation6 + $0x9c] sm:$0xf]
        %v1054 = vld [vmem:[#allocation6 + $0xa0] sm:$0xf]
        %v1055 = vld [vmem:[#allocation6 + $0xa4] sm:$0xf]
        %v1056 = vld [vmem:[#allocation6 + $0xa8] sm:$0xf]
        %v1057 = vld [vmem:[#allocation6 + $0xac] sm:$0xf]
        %v1058 = vld [vmem:[#allocation6 + $0xb0] sm:$0xf]
        %v1059 = vld [vmem:[#allocation6 + $0xb4] sm:$0xf]
        %v1060 = vld [vmem:[#allocation6 + $0xb8] sm:$0xf]
        %v1061 = vld [vmem:[#allocation6 + $0xbc] sm:$0xf]
        %v1062 = vld [vmem:[#allocation6 + $0xc0] sm:$0xf]
        %v1063 = vld [vmem:[#allocation6 + $0xc4] sm:$0xf]
        %v1064 = vld [vmem:[#allocation6 + $0xc8] sm:$0xf]
        %v1065 = vld [vmem:[#allocation6 + $0xcc] sm:$0xf]
        %v1066 = vld [vmem:[#allocation6 + $0xd0] sm:$0xf]
        %v1067 = vld [vmem:[#allocation6 + $0xd4] sm:$0xf]
        %v1068 = vld [vmem:[#allocation6 + $0xd8] sm:$0xf]
        %v1069 = vld [vmem:[#allocation6 + $0xdc] sm:$0xf]
        %v1070 = vld [vmem:[#allocation6 + $0xe0] sm:$0xf]
        %v1071 = vld [vmem:[#allocation6 + $0xe4] sm:$0xf]
        %v1072 = vld [vmem:[#allocation6 + $0xe8] sm:$0xf]
        %v1073 = vld [vmem:[#allocation6 + $0xec] sm:$0xf]
        %v1074 = vld [vmem:[#allocation6 + $0xf0] sm:$0xf]
        %v1075 = vld [vmem:[#allocation6 + $0xf4] sm:$0xf]
        %v1076 = vld [vmem:[#allocation6 + $0xf8] sm:$0xf]
        %v1077 = vld [vmem:[#allocation6 + $0xfc] sm:$0xf]
        %v1078 = vld [vmem:[#allocation6 + $0x100] sm:$0xf]
        %v1079 = vld [vmem:[#allocation6 + $0x104] sm:$0xf]
        %v1080 = vld [vmem:[#allocation6 + $0x108] sm:$0xf]
        %v1081 = vld [vmem:[#allocation6 + $0x10c] sm:$0xf]
        %v1082 = vld [vmem:[#allocation6 + $0x110] sm:$0xf]
        %v1083 = vld [vmem:[#allocation6 + $0x114] sm:$0xf]
        %v1084 = vld [vmem:[#allocation6 + $0x118] sm:$0xf]
        %v1085 = vld [vmem:[#allocation6 + $0x11c] sm:$0xf]
        %v1086 = vld [vmem:[#allocation6 + $0x120] sm:$0xf]
        %v1087 = vld [vmem:[#allocation6 + $0x124] sm:$0xf]
        %v1088 = vld [vmem:[#allocation6 + $0x128] sm:$0xf]
        %v1089 = vld [vmem:[#allocation6 + $0x12c] sm:$0xf]
        %v1090 = vld [vmem:[#allocation6 + $0x130] sm:$0xf]
        %v1091 = vld [vmem:[#allocation6 + $0x134] sm:$0xf]
        %v1092 = vld [vmem:[#allocation6 + $0x138] sm:$0xf]
        %v1093 = vld [vmem:[#allocation6 + $0x13c] sm:$0xf]
        %v1094 = vld [vmem:[#allocation6 + $0x140] sm:$0xf]
        %v1095 = vld [vmem:[#allocation6 + $0x144] sm:$0xf]
        %v1096 = vld [vmem:[#allocation6 + $0x148] sm:$0xf]
        %v1097 = vld [vmem:[#allocation6 + $0x14c] sm:$0xf]
        %v1098 = vld [vmem:[#allocation6 + $0x150] sm:$0xf]
        %v1099 = vld [vmem:[#allocation6 + $0x154] sm:$0xf]
        %v1100 = vld [vmem:[#allocation6 + $0x158] sm:$0xf]
        %v1101 = vld [vmem:[#allocation6 + $0x15c] sm:$0xf]
        %v1102 = vld [vmem:[#allocation6 + $0x160] sm:$0xf]
        %v1103 = vld [vmem:[#allocation6 + $0x164] sm:$0xf]
        %v1104 = vld [vmem:[#allocation6 + $0x168] sm:$0xf]
        %v1105 = vld [vmem:[#allocation6 + $0x16c] sm:$0xf]
        %v1106 = vld [vmem:[#allocation6 + $0x170] sm:$0xf]
        %v1107 = vld [vmem:[#allocation6 + $0x174] sm:$0xf]
        %v1108 = vld [vmem:[#allocation6 + $0x178] sm:$0xf]
        %v1109 = vld [vmem:[#allocation6 + $0x17c] sm:$0xf]
        %v1110 = vld [vmem:[#allocation6 + $0x180] sm:$0xf]
        %v1111 = vld [vmem:[#allocation6 + $0x184] sm:$0xf]
        %v1112 = vld [vmem:[#allocation6 + $0x188] sm:$0xf]
        %v1113 = vld [vmem:[#allocation6 + $0x18c] sm:$0xf]
        %v1114 = vld [vmem:[#allocation6 + $0x190] sm:$0xf]
        %v1115 = vld [vmem:[#allocation6 + $0x194] sm:$0xf]
        %v1116 = vld [vmem:[#allocation6 + $0x198] sm:$0xf]
        %v1117 = vld [vmem:[#allocation6 + $0x19c] sm:$0xf]
        %v1118 = vld [vmem:[#allocation6 + $0x1a0] sm:$0xf]
        %v1119 = vld [vmem:[#allocation6 + $0x1a4] sm:$0xf]
        %v1120 = vld [vmem:[#allocation6 + $0x1a8] sm:$0xf]
        %v1121 = vld [vmem:[#allocation6 + $0x1ac] sm:$0xf]
        %v1122 = vld [vmem:[#allocation6 + $0x1b0] sm:$0xf]
        %v1123 = vld [vmem:[#allocation6 + $0x1b4] sm:$0xf]
        %v1124 = vld [vmem:[#allocation6 + $0x1b8] sm:$0xf]
        %v1125 = vld [vmem:[#allocation6 + $0x1bc] sm:$0xf]
        %v1126 = vld [vmem:[#allocation6 + $0x1c0] sm:$0xf]
        %v1127 = vld [vmem:[#allocation6 + $0x1c4] sm:$0xf]
        %v1128 = vld [vmem:[#allocation6 + $0x1c8] sm:$0xf]
        %v1129 = vld [vmem:[#allocation6 + $0x1cc] sm:$0xf]
        %v1130 = vld [vmem:[#allocation6 + $0x1d0] sm:$0xf]
        %v1131 = vld [vmem:[#allocation6 + $0x1d4] sm:$0xf]
        %v1132 = vld [vmem:[#allocation6 + $0x1d8] sm:$0xf]
        %v1133 = vld [vmem:[#allocation6 + $0x1dc] sm:$0xf]
        %v1134 = vld [vmem:[#allocation6 + $0x1e0] sm:$0xf]
        %v1135 = vld [vmem:[#allocation6 + $0x1e4] sm:$0xf]
        %v1136 = vld [vmem:[#allocation6 + $0x1e8] sm:$0xf]
        %v1137 = vld [vmem:[#allocation6 + $0x1ec] sm:$0xf]
        %v1138 = vld [vmem:[#allocation6 + $0x1f0] sm:$0xf]
        %v1139 = vld [vmem:[#allocation6 + $0x1f4] sm:$0xf]
        %v1140 = vld [vmem:[#allocation6 + $0x1f8] sm:$0xf]
        %v1141 = vld [vmem:[#allocation6 + $0x1fc] sm:$0xf]
        %v1142 = vld [vmem:[#allocation6 + $0x200] sm:$0xf]
        %v1143 = vld [vmem:[#allocation6 + $0x204] sm:$0xf]
        %v1144 = vld [vmem:[#allocation6 + $0x208] sm:$0xf]
        %v1145 = vld [vmem:[#allocation6 + $0x20c] sm:$0xf]
        %v1146 = vld [vmem:[#allocation6 + $0x210] sm:$0xf]
        %v1147 = vld [vmem:[#allocation6 + $0x214] sm:$0xf]
        %v1148 = vld [vmem:[#allocation6 + $0x218] sm:$0xf]
        %v1149 = vld [vmem:[#allocation6 + $0x21c] sm:$0xf]
        %v1150 = vld [vmem:[#allocation6 + $0x220] sm:$0xf]
        %v1151 = vld [vmem:[#allocation6 + $0x224] sm:$0xf]
        %v1152 = vld [vmem:[#allocation6 + $0x228] sm:$0xf]
        %v1153 = vld [vmem:[#allocation6 + $0x22c] sm:$0xf]
        %v1154 = vld [vmem:[#allocation6 + $0x230] sm:$0xf]
        %v1155 = vld [vmem:[#allocation6 + $0x234] sm:$0xf]
        %v1156 = vld [vmem:[#allocation6 + $0x238] sm:$0xf]
        %v1157 = vld [vmem:[#allocation6 + $0x23c] sm:$0xf]
        %v1158 = vld [vmem:[#allocation8] sm:$0x1]
        %v1160 = vlaneseq
        %v1161 = vshrl.u32 %v1160, 7
        %v1162 = vsub.s32 0, %v1161
        %v1163 = vrot.slane %v1158, %v1162
        %v1309 = vunpack.c.l.b16 %v1014
        %v1310 = vunpack.c.l.b16 %v1015
        %v1311 = vunpack.c.l.b16 %v1016
        %v1312 = vunpack.c.l.b16 %v1017
        %v1313 = vunpack.c.l.b16 %v1018
        %v1314 = vunpack.c.l.b16 %v1019
        %v1315 = vunpack.c.l.b16 %v1020
        %v1316 = vunpack.c.l.b16 %v1021
        %v1317 = vunpack.c.l.b16 %v1022
        %v1318 = vunpack.c.l.b16 %v1023
        %v1319 = vunpack.c.l.b16 %v1024
        %v1320 = vunpack.c.l.b16 %v1025
        %v1321 = vunpack.c.l.b16 %v1026
        %v1322 = vunpack.c.l.b16 %v1027
        %v1323 = vunpack.c.l.b16 %v1028
        %v1324 = vunpack.c.l.b16 %v1029
        %v1325 = vunpack.c.l.b16 %v1030
        %v1326 = vunpack.c.l.b16 %v1031
        %v1327 = vunpack.c.l.b16 %v1032
        %v1328 = vunpack.c.l.b16 %v1033
        %v1329 = vunpack.c.l.b16 %v1034
        %v1330 = vunpack.c.l.b16 %v1035
        %v1331 = vunpack.c.l.b16 %v1036
        %v1332 = vunpack.c.l.b16 %v1037
        %v1333 = vunpack.c.l.b16 %v1038
        %v1334 = vunpack.c.l.b16 %v1039
        %v1335 = vunpack.c.l.b16 %v1040
        %v1336 = vunpack.c.l.b16 %v1041
        %v1337 = vunpack.c.l.b16 %v1042
        %v1338 = vunpack.c.l.b16 %v1043
        %v1339 = vunpack.c.l.b16 %v1044
        %v1340 = vunpack.c.l.b16 %v1045
        %v1341 = vunpack.c.l.b16 %v1046
        %v1342 = vunpack.c.l.b16 %v1047
        %v1343 = vunpack.c.l.b16 %v1048
        %v1344 = vunpack.c.l.b16 %v1049
        %v1345 = vunpack.c.l.b16 %v1050
        %v1346 = vunpack.c.l.b16 %v1051
        %v1347 = vunpack.c.l.b16 %v1052
        %v1348 = vunpack.c.l.b16 %v1053
        %v1349 = vunpack.c.l.b16 %v1054
        %v1350 = vunpack.c.l.b16 %v1055
        %v1351 = vunpack.c.l.b16 %v1056
        %v1352 = vunpack.c.l.b16 %v1057
        %v1353 = vunpack.c.l.b16 %v1058
        %v1354 = vunpack.c.l.b16 %v1059
        %v1355 = vunpack.c.l.b16 %v1060
        %v1356 = vunpack.c.l.b16 %v1061
        %v1357 = vunpack.c.l.b16 %v1062
        %v1358 = vunpack.c.l.b16 %v1063
        %v1359 = vunpack.c.l.b16 %v1064
        %v1360 = vunpack.c.l.b16 %v1065
        %v1361 = vunpack.c.l.b16 %v1066
        %v1362 = vunpack.c.l.b16 %v1067
        %v1363 = vunpack.c.l.b16 %v1068
        %v1364 = vunpack.c.l.b16 %v1069
        %v1365 = vunpack.c.l.b16 %v1070
        %v1366 = vunpack.c.l.b16 %v1071
        %v1367 = vunpack.c.l.b16 %v1072
        %v1368 = vunpack.c.l.b16 %v1073
        %v1369 = vunpack.c.l.b16 %v1074
        %v1370 = vunpack.c.l.b16 %v1075
        %v1371 = vunpack.c.l.b16 %v1076
        %v1372 = vunpack.c.l.b16 %v1077
        %v1373 = vunpack.c.l.b16 %v1078
        %v1374 = vunpack.c.l.b16 %v1079
        %v1375 = vunpack.c.l.b16 %v1080
        %v1376 = vunpack.c.l.b16 %v1081
        %v1377 = vunpack.c.l.b16 %v1082
        %v1378 = vunpack.c.l.b16 %v1083
        %v1379 = vunpack.c.l.b16 %v1084
        %v1380 = vunpack.c.l.b16 %v1085
        %v1381 = vunpack.c.l.b16 %v1086
        %v1382 = vunpack.c.l.b16 %v1087
        %v1383 = vunpack.c.l.b16 %v1088
        %v1384 = vunpack.c.l.b16 %v1089
        %v1385 = vunpack.c.l.b16 %v1090
        %v1386 = vunpack.c.l.b16 %v1091
        %v1387 = vunpack.c.l.b16 %v1092
        %v1388 = vunpack.c.l.b16 %v1093
        %v1389 = vunpack.c.l.b16 %v1094
        %v1390 = vunpack.c.l.b16 %v1095
        %v1391 = vunpack.c.l.b16 %v1096
        %v1392 = vunpack.c.l.b16 %v1097
        %v1393 = vunpack.c.l.b16 %v1098
        %v1394 = vunpack.c.l.b16 %v1099
        %v1395 = vunpack.c.l.b16 %v1100
        %v1396 = vunpack.c.l.b16 %v1101
        %v1397 = vunpack.c.l.b16 %v1102
        %v1398 = vunpack.c.l.b16 %v1103
        %v1399 = vunpack.c.l.b16 %v1104
        %v1400 = vunpack.c.l.b16 %v1105
        %v1401 = vunpack.c.l.b16 %v1106
        %v1402 = vunpack.c.l.b16 %v1107
        %v1403 = vunpack.c.l.b16 %v1108
        %v1404 = vunpack.c.l.b16 %v1109
        %v1405 = vunpack.c.l.b16 %v1110
        %v1406 = vunpack.c.l.b16 %v1111
        %v1407 = vunpack.c.l.b16 %v1112
        %v1408 = vunpack.c.l.b16 %v1113
        %v1409 = vunpack.c.l.b16 %v1114
        %v1410 = vunpack.c.l.b16 %v1115
        %v1411 = vunpack.c.l.b16 %v1116
        %v1412 = vunpack.c.l.b16 %v1117
        %v1413 = vunpack.c.l.b16 %v1118
        %v1414 = vunpack.c.l.b16 %v1119
        %v1415 = vunpack.c.l.b16 %v1120
        %v1416 = vunpack.c.l.b16 %v1121
        %v1417 = vunpack.c.l.b16 %v1122
        %v1418 = vunpack.c.l.b16 %v1123
        %v1419 = vunpack.c.l.b16 %v1124
        %v1420 = vunpack.c.l.b16 %v1125
        %v1421 = vunpack.c.l.b16 %v1126
        %v1422 = vunpack.c.l.b16 %v1127
        %v1423 = vunpack.c.l.b16 %v1128
        %v1424 = vunpack.c.l.b16 %v1129
        %v1425 = vunpack.c.l.b16 %v1130
        %v1426 = vunpack.c.l.b16 %v1131
        %v1427 = vunpack.c.l.b16 %v1132
        %v1428 = vunpack.c.l.b16 %v1133
        %v1429 = vunpack.c.l.b16 %v1134
        %v1430 = vunpack.c.l.b16 %v1135
        %v1431 = vunpack.c.l.b16 %v1136
        %v1432 = vunpack.c.l.b16 %v1137
        %v1433 = vunpack.c.l.b16 %v1138
        %v1434 = vunpack.c.l.b16 %v1139
        %v1435 = vunpack.c.l.b16 %v1140
        %v1436 = vunpack.c.l.b16 %v1141
        %v1437 = vunpack.c.l.b16 %v1142
        %v1438 = vunpack.c.l.b16 %v1143
        %v1439 = vunpack.c.l.b16 %v1144
        %v1440 = vunpack.c.l.b16 %v1145
        %v1441 = vunpack.c.l.b16 %v1146
        %v1442 = vunpack.c.l.b16 %v1147
        %v1443 = vunpack.c.l.b16 %v1148
        %v1444 = vunpack.c.l.b16 %v1149
        %v1445 = vunpack.c.l.b16 %v1150
        %v1446 = vunpack.c.l.b16 %v1151
        %v1447 = vunpack.c.l.b16 %v1152
        %v1448 = vunpack.c.l.b16 %v1153
        %v1449 = vunpack.c.l.b16 %v1154
        %v1450 = vunpack.c.l.b16 %v1155
        %v1451 = vunpack.c.l.b16 %v1156
        %v1452 = vunpack.c.l.b16 %v1157
        %v1453 = vpack.c.b16 %v1310, %v1309
        %v1454 = vpack.c.b16 %v1312, %v1311
        %v1455 = vpack.c.b16 %v1314, %v1313
        %v1456 = vpack.c.b16 %v1316, %v1315
        %v1457 = vpack.c.b16 %v1318, %v1317
        %v1458 = vpack.c.b16 %v1320, %v1319
        %v1459 = vpack.c.b16 %v1322, %v1321
        %v1460 = vpack.c.b16 %v1324, %v1323
        %v1461 = vpack.c.b16 %v1326, %v1325
        %v1462 = vpack.c.b16 %v1328, %v1327
        %v1463 = vpack.c.b16 %v1330, %v1329
        %v1464 = vpack.c.b16 %v1332, %v1331
        %v1465 = vpack.c.b16 %v1334, %v1333
        %v1466 = vpack.c.b16 %v1336, %v1335
        %v1467 = vpack.c.b16 %v1338, %v1337
        %v1468 = vpack.c.b16 %v1340, %v1339
        %v1469 = vpack.c.b16 %v1342, %v1341
        %v1470 = vpack.c.b16 %v1344, %v1343
        %v1471 = vpack.c.b16 %v1346, %v1345
        %v1472 = vpack.c.b16 %v1348, %v1347
        %v1473 = vpack.c.b16 %v1350, %v1349
        %v1474 = vpack.c.b16 %v1352, %v1351
        %v1475 = vpack.c.b16 %v1354, %v1353
        %v1476 = vpack.c.b16 %v1356, %v1355
        %v1477 = vpack.c.b16 %v1358, %v1357
        %v1478 = vpack.c.b16 %v1360, %v1359
        %v1479 = vpack.c.b16 %v1362, %v1361
        %v1480 = vpack.c.b16 %v1364, %v1363
        %v1481 = vpack.c.b16 %v1366, %v1365
        %v1482 = vpack.c.b16 %v1368, %v1367
        %v1483 = vpack.c.b16 %v1370, %v1369
        %v1484 = vpack.c.b16 %v1372, %v1371
        %v1485 = vpack.c.b16 %v1374, %v1373
        %v1486 = vpack.c.b16 %v1376, %v1375
        %v1487 = vpack.c.b16 %v1378, %v1377
        %v1488 = vpack.c.b16 %v1380, %v1379
        %v1489 = vpack.c.b16 %v1382, %v1381
        %v1490 = vpack.c.b16 %v1384, %v1383
        %v1491 = vpack.c.b16 %v1386, %v1385
        %v1492 = vpack.c.b16 %v1388, %v1387
        %v1493 = vpack.c.b16 %v1390, %v1389
        %v1494 = vpack.c.b16 %v1392, %v1391
        %v1495 = vpack.c.b16 %v1394, %v1393
        %v1496 = vpack.c.b16 %v1396, %v1395
        %v1497 = vpack.c.b16 %v1398, %v1397
        %v1498 = vpack.c.b16 %v1400, %v1399
        %v1499 = vpack.c.b16 %v1402, %v1401
        %v1500 = vpack.c.b16 %v1404, %v1403
        %v1501 = vpack.c.b16 %v1406, %v1405
        %v1502 = vpack.c.b16 %v1408, %v1407
        %v1503 = vpack.c.b16 %v1410, %v1409
        %v1504 = vpack.c.b16 %v1412, %v1411
        %v1505 = vpack.c.b16 %v1414, %v1413
        %v1506 = vpack.c.b16 %v1416, %v1415
        %v1507 = vpack.c.b16 %v1418, %v1417
        %v1508 = vpack.c.b16 %v1420, %v1419
        %v1509 = vpack.c.b16 %v1422, %v1421
        %v1510 = vpack.c.b16 %v1424, %v1423
        %v1511 = vpack.c.b16 %v1426, %v1425
        %v1512 = vpack.c.b16 %v1428, %v1427
        %v1513 = vpack.c.b16 %v1430, %v1429
        %v1514 = vpack.c.b16 %v1432, %v1431
        %v1515 = vpack.c.b16 %v1434, %v1433
        %v1516 = vpack.c.b16 %v1436, %v1435
        %v1517 = vpack.c.b16 %v1438, %v1437
        %v1518 = vpack.c.b16 %v1440, %v1439
        %v1519 = vpack.c.b16 %v1442, %v1441
        %v1520 = vpack.c.b16 %v1444, %v1443
        %v1521 = vpack.c.b16 %v1446, %v1445
        %v1522 = vpack.c.b16 %v1448, %v1447
        %v1523 = vpack.c.b16 %v1450, %v1449
        %v1524 = vpack.c.b16 %v1452, %v1451
        %1597 = vmatprep.subr.bf16.mxu0 0
        %1598 = vmatpush1.bf16.msra.mxu0 %v1453
        %1599 = vmatprep.subr.bf16.mxu0 0
        %1600 = vmatpush1.bf16.msra.mxu0 %v1454
        %1601 = vmatprep.subr.bf16.mxu0 0
        %1602 = vmatpush1.bf16.msra.mxu0 %v1455
        %1603 = vmatprep.subr.bf16.mxu0 0
        %1604 = vmatpush1.bf16.msra.mxu0 %v1456
        %1605 = vmatprep.subr.bf16.mxu0 0
        %1606 = vmatpush1.bf16.msra.mxu0 %v1457
        %1607 = vmatprep.subr.bf16.mxu0 0
        %1608 = vmatpush1.bf16.msra.mxu0 %v1458
        %1609 = vmatprep.subr.bf16.mxu0 0
        %1610 = vmatpush1.bf16.msra.mxu0 %v1459
        %1611 = vmatprep.subr.bf16.mxu0 0
        %1612 = vmatpush1.bf16.msra.mxu0 %v1460
        %1613 = vmatprep.subr.bf16.mxu0 0
        %1614 = vmatpush1.bf16.msra.mxu0 %v1461
        %1615 = vmatprep.subr.bf16.mxu0 0
        %1616 = vmatpush1.bf16.msra.mxu0 %v1462
        %1617 = vmatprep.subr.bf16.mxu0 0
        %1618 = vmatpush1.bf16.msra.mxu0 %v1463
        %1619 = vmatprep.subr.bf16.mxu0 0
        %1620 = vmatpush1.bf16.msra.mxu0 %v1464
        %1621 = vmatprep.subr.bf16.mxu0 0
        %1622 = vmatpush1.bf16.msra.mxu0 %v1465
        %1623 = vmatprep.subr.bf16.mxu0 0
        %1624 = vmatpush1.bf16.msra.mxu0 %v1466
        %1625 = vmatprep.subr.bf16.mxu0 0
        %1626 = vmatpush1.bf16.msra.mxu0 %v1467
        %1627 = vmatprep.subr.bf16.mxu0 0
        %1628 = vmatpush1.bf16.msra.mxu0 %v1468
        %1629 = vmatprep.mubr.bf16.mxu0 %v837
        %1630 = vmatmul.mubr.bf16.gmra.mrb[0].mxu0 %v813
        %v1631 = vpop.f32.mrb[0].mxu0
        %v1632 = vadd.f32 %v1163, %v1631
        %v1633 = vpop.f32.mrb[0].mxu0
        %v1634 = vpop.f32.mrb[0].mxu0
        %v1635 = vadd.f32 %v1163, %v1634
        %v1636 = vpop.f32.mrb[0].mxu0
        %1637 = vmatprep.mubr.bf16.mxu0 %v838
        %1638 = vmatmul.mubr.bf16.gmra.mrb[0].mxu0 %v814
        %v1639 = vpop.f32.mrb[0].mxu0
        %v1640 = vadd.f32 %v1163, %v1639
        %v1641 = vpop.f32.mrb[0].mxu0
        %v1642 = vpop.f32.mrb[0].mxu0
        %v1643 = vadd.f32 %v1163, %v1642
        %v1644 = vpop.f32.mrb[0].mxu0
        %1645 = vmatprep.mubr.bf16.mxu0 %v839
        %1646 = vmatmul.mubr.bf16.gmra.mrb[0].mxu0 %v815
        %v1647 = vpop.f32.mrb[0].mxu0
        %v1648 = vadd.f32 %v1163, %v1647
        %v1649 = vpop.f32.mrb[0].mxu0
        %v1650 = vpop.f32.mrb[0].mxu0
        %v1651 = vadd.f32 %v1163, %v1650
        %v1652 = vpop.f32.mrb[0].mxu0
        %1653 = vmatprep.mubr.bf16.mxu0 %v840
        %1654 = vmatmul.mubr.bf16.gmra.mrb[0].mxu0 %v816
        %v1655 = vpop.f32.mrb[0].mxu0
        %v1656 = vadd.f32 %v1163, %v1655
        %v1657 = vpop.f32.mrb[0].mxu0
        %v1658 = vpop.f32.mrb[0].mxu0
        %v1659 = vadd.f32 %v1163, %v1658
        %v1660 = vpop.f32.mrb[0].mxu0
        %1661 = vmatprep.mubr.bf16.mxu0 %v841
        %1662 = vmatmul.mubr.bf16.gmra.mrb[0].mxu0 %v817
        %v1663 = vpop.f32.mrb[0].mxu0
        %v1664 = vadd.f32 %v1163, %v1663
        %v1665 = vpop.f32.mrb[0].mxu0
        %v1666 = vpop.f32.mrb[0].mxu0
        %v1667 = vadd.f32 %v1163, %v1666
        %v1668 = vpop.f32.mrb[0].mxu0
        %1669 = vmatprep.mubr.bf16.mxu0 %v842
        %1670 = vmatmul.mubr.bf16.gmra.mrb[0].mxu0 %v818
        %v1671 = vpop.f32.mrb[0].mxu0
        %v1672 = vadd.f32 %v1163, %v1671
        %v1673 = vpop.f32.mrb[0].mxu0
        %v1674 = vpop.f32.mrb[0].mxu0
        %v1675 = vadd.f32 %v1163, %v1674
        %v1676 = vpop.f32.mrb[0].mxu0
        %1677 = vmatprep.mubr.bf16.mxu0 %v843
        %1678 = vmatmul.mubr.bf16.gmra.mrb[0].mxu0 %v819
        %v1679 = vpop.f32.mrb[0].mxu0
        %v1680 = vadd.f32 %v1163, %v1679
        %v1681 = vpop.f32.mrb[0].mxu0
        %v1682 = vpop.f32.mrb[0].mxu0
        %v1683 = vadd.f32 %v1163, %v1682
        %v1684 = vpop.f32.mrb[0].mxu0
        %1685 = vmatprep.mubr.bf16.mxu0 %v844
        %1686 = vmatmul.mubr.bf16.gmra.mrb[0].mxu0 %v820
        %v1687 = vpop.f32.mrb[0].mxu0
        %v1688 = vadd.f32 %v1163, %v1687
        %v1689 = vpop.f32.mrb[0].mxu0
        %v1690 = vpop.f32.mrb[0].mxu0
        %v1691 = vadd.f32 %v1163, %v1690
        %v1692 = vpop.f32.mrb[0].mxu0
        %1693 = vdwg.mxu0
        %1694 = vmatprep.subr.bf16.mxu0 0
        %1695 = vmatpush1.bf16.msra.mxu0 %v1469
        %1696 = vmatprep.subr.bf16.mxu0 0
        %1697 = vmatpush1.bf16.msra.mxu0 %v1470
        %1698 = vmatprep.subr.bf16.mxu0 0
        %1699 = vmatpush1.bf16.msra.mxu0 %v1471
        %1700 = vmatprep.subr.bf16.mxu0 0
        %1701 = vmatpush1.bf16.msra.mxu0 %v1472
        %1702 = vmatprep.subr.bf16.mxu0 0
        %1703 = vmatpush1.bf16.msra.mxu0 %v1473
        %1704 = vmatprep.subr.bf16.mxu0 0
        %1705 = vmatpush1.bf16.msra.mxu0 %v1474
        %1706 = vmatprep.subr.bf16.mxu0 0
        %1707 = vmatpush1.bf16.msra.mxu0 %v1475
        %1708 = vmatprep.subr.bf16.mxu0 0
        %1709 = vmatpush1.bf16.msra.mxu0 %v1476
        %1710 = vmatprep.subr.bf16.mxu0 0
        %1711 = vmatpush1.bf16.msra.mxu0 %v1477
        %1712 = vmatprep.subr.bf16.mxu0 0
        %1713 = vmatpush1.bf16.msra.mxu0 %v1478
        %1714 = vmatprep.subr.bf16.mxu0 0
        %1715 = vmatpush1.bf16.msra.mxu0 %v1479
        %1716 = vmatprep.subr.bf16.mxu0 0
        %1717 = vmatpush1.bf16.msra.mxu0 %v1480
        %1718 = vmatprep.subr.bf16.mxu0 0
        %1719 = vmatpush1.bf16.msra.mxu0 %v1481
        %1720 = vmatprep.subr.bf16.mxu0 0
        %1721 = vmatpush1.bf16.msra.mxu0 %v1482
        %1722 = vmatprep.subr.bf16.mxu0 0
        %1723 = vmatpush1.bf16.msra.mxu0 %v1483
        %1724 = vmatprep.subr.bf16.mxu0 0
        %1725 = vmatpush1.bf16.msra.mxu0 %v1484
        %1726 = vmatprep.mubr.bf16.mxu0 %v885
        %1727 = vmatmul.mubr.bf16.gmra.mrb[0].mxu0 %v861
        %v1728 = vpop.f32.mrb[0].mxu0
        %v1729 = vadd.f32 %v1632, %v1728
        %v1730 = vpop.f32.mrb[0].mxu0
        %v1731 = vpop.f32.mrb[0].mxu0
        %v1732 = vadd.f32 %v1635, %v1731
        %v1733 = vpop.f32.mrb[0].mxu0
        %1734 = vmatprep.mubr.bf16.mxu0 %v886
        %1735 = vmatmul.mubr.bf16.gmra.mrb[0].mxu0 %v862
        %v1736 = vpop.f32.mrb[0].mxu0
        %v1737 = vadd.f32 %v1640, %v1736
        %v1738 = vpop.f32.mrb[0].mxu0
        %v1739 = vpop.f32.mrb[0].mxu0
        %v1740 = vadd.f32 %v1643, %v1739
        %v1741 = vpop.f32.mrb[0].mxu0
        %1742 = vmatprep.mubr.bf16.mxu0 %v887
        %1743 = vmatmul.mubr.bf16.gmra.mrb[0].mxu0 %v863
        %v1744 = vpop.f32.mrb[0].mxu0
        %v1745 = vadd.f32 %v1648, %v1744
        %v1746 = vpop.f32.mrb[0].mxu0
        %v1747 = vpop.f32.mrb[0].mxu0
        %v1748 = vadd.f32 %v1651, %v1747
        %v1749 = vpop.f32.mrb[0].mxu0
        %1750 = vmatprep.mubr.bf16.mxu0 %v888
        %1751 = vmatmul.mubr.bf16.gmra.mrb[0].mxu0 %v864
        %v1752 = vpop.f32.mrb[0].mxu0
        %v1753 = vadd.f32 %v1656, %v1752
        %v1754 = vpop.f32.mrb[0].mxu0
        %v1755 = vpop.f32.mrb[0].mxu0
        %v1756 = vadd.f32 %v1659, %v1755
        %v1757 = vpop.f32.mrb[0].mxu0
        %1758 = vmatprep.mubr.bf16.mxu0 %v889
        %1759 = vmatmul.mubr.bf16.gmra.mrb[0].mxu0 %v865
        %v1760 = vpop.f32.mrb[0].mxu0
        %v1761 = vadd.f32 %v1664, %v1760
        %v1762 = vpop.f32.mrb[0].mxu0
        %v1763 = vpop.f32.mrb[0].mxu0
        %v1764 = vadd.f32 %v1667, %v1763
        %v1765 = vpop.f32.mrb[0].mxu0
        %1766 = vmatprep.mubr.bf16.mxu0 %v890
        %1767 = vmatmul.mubr.bf16.gmra.mrb[0].mxu0 %v866
        %v1768 = vpop.f32.mrb[0].mxu0
        %v1769 = vadd.f32 %v1672, %v1768
        %v1770 = vpop.f32.mrb[0].mxu0
        %v1771 = vpop.f32.mrb[0].mxu0
        %v1772 = vadd.f32 %v1675, %v1771
        %v1773 = vpop.f32.mrb[0].mxu0
        %1774 = vmatprep.mubr.bf16.mxu0 %v891
        %1775 = vmatmul.mubr.bf16.gmra.mrb[0].mxu0 %v867
        %v1776 = vpop.f32.mrb[0].mxu0
        %v1777 = vadd.f32 %v1680, %v1776
        %v1778 = vpop.f32.mrb[0].mxu0
        %v1779 = vpop.f32.mrb[0].mxu0
        %v1780 = vadd.f32 %v1683, %v1779
        %v1781 = vpop.f32.mrb[0].mxu0
        %1782 = vmatprep.mubr.bf16.mxu0 %v892
        %1783 = vmatmul.mubr.bf16.gmra.mrb[0].mxu0 %v868
        %v1784 = vpop.f32.mrb[0].mxu0
        %v1785 = vadd.f32 %v1688, %v1784
        %v1786 = vpop.f32.mrb[0].mxu0
        %v1787 = vpop.f32.mrb[0].mxu0
        %v1788 = vadd.f32 %v1691, %v1787
        %v1789 = vpop.f32.mrb[0].mxu0
        %1790 = vdwg.mxu0
        %1791 = vmatprep.subr.bf16.mxu0 0
        %1792 = vmatpush1.bf16.msra.mxu0 %v1485
        %1793 = vmatprep.subr.bf16.mxu0 0
        %1794 = vmatpush1.bf16.msra.mxu0 %v1486
        %1795 = vmatprep.subr.bf16.mxu0 0
        %1796 = vmatpush1.bf16.msra.mxu0 %v1487
        %1797 = vmatprep.subr.bf16.mxu0 0
        %1798 = vmatpush1.bf16.msra.mxu0 %v1488
        %1799 = vmatprep.subr.bf16.mxu0 0
        %1800 = vmatpush1.bf16.msra.mxu0 %v1489
        %1801 = vmatprep.subr.bf16.mxu0 0
        %1802 = vmatpush1.bf16.msra.mxu0 %v1490
        %1803 = vmatprep.subr.bf16.mxu0 0
        %1804 = vmatpush1.bf16.msra.mxu0 %v1491
        %1805 = vmatprep.subr.bf16.mxu0 0
        %1806 = vmatpush1.bf16.msra.mxu0 %v1492
        %1807 = vmatprep.subr.bf16.mxu0 0
        %1808 = vmatpush1.bf16.msra.mxu0 %v1493
        %1809 = vmatprep.subr.bf16.mxu0 0
        %1810 = vmatpush1.bf16.msra.mxu0 %v1494
        %1811 = vmatprep.subr.bf16.mxu0 0
        %1812 = vmatpush1.bf16.msra.mxu0 %v1495
        %1813 = vmatprep.subr.bf16.mxu0 0
        %1814 = vmatpush1.bf16.msra.mxu0 %v1496
        %1815 = vmatprep.subr.bf16.mxu0 0
        %1816 = vmatpush1.bf16.msra.mxu0 %v1497
        %1817 = vmatprep.subr.bf16.mxu0 0
        %1818 = vmatpush1.bf16.msra.mxu0 %v1498
        %1819 = vmatprep.subr.bf16.mxu0 0
        %1820 = vmatpush1.bf16.msra.mxu0 %v1499
        %1821 = vmatprep.subr.bf16.mxu0 0
        %1822 = vmatpush1.bf16.msra.mxu0 %v1500
        %1823 = vmatprep.mubr.bf16.mxu0 %v933
        %1824 = vmatmul.mubr.bf16.gmra.mrb[0].mxu0 %v909
        %v1825 = vpop.f32.mrb[0].mxu0
        %v1826 = vadd.f32 %v1729, %v1825
        %v1827 = vpop.f32.mrb[0].mxu0
        %v1828 = vpop.f32.mrb[0].mxu0
        %v1829 = vadd.f32 %v1732, %v1828
        %v1830 = vpop.f32.mrb[0].mxu0
        %1831 = vmatprep.mubr.bf16.mxu0 %v934
        %1832 = vmatmul.mubr.bf16.gmra.mrb[0].mxu0 %v910
        %v1833 = vpop.f32.mrb[0].mxu0
        %v1834 = vadd.f32 %v1737, %v1833
        %v1835 = vpop.f32.mrb[0].mxu0
        %v1836 = vpop.f32.mrb[0].mxu0
        %v1837 = vadd.f32 %v1740, %v1836
        %v1838 = vpop.f32.mrb[0].mxu0
        %1839 = vmatprep.mubr.bf16.mxu0 %v935
        %1840 = vmatmul.mubr.bf16.gmra.mrb[0].mxu0 %v911
        %v1841 = vpop.f32.mrb[0].mxu0
        %v1842 = vadd.f32 %v1745, %v1841
        %v1843 = vpop.f32.mrb[0].mxu0
        %v1844 = vpop.f32.mrb[0].mxu0
        %v1845 = vadd.f32 %v1748, %v1844
        %v1846 = vpop.f32.mrb[0].mxu0
        %1847 = vmatprep.mubr.bf16.mxu0 %v936
        %1848 = vmatmul.mubr.bf16.gmra.mrb[0].mxu0 %v912
        %v1849 = vpop.f32.mrb[0].mxu0
        %v1850 = vadd.f32 %v1753, %v1849
        %v1851 = vpop.f32.mrb[0].mxu0
        %v1852 = vpop.f32.mrb[0].mxu0
        %v1853 = vadd.f32 %v1756, %v1852
        %v1854 = vpop.f32.mrb[0].mxu0
        %1855 = vmatprep.mubr.bf16.mxu0 %v937
        %1856 = vmatmul.mubr.bf16.gmra.mrb[0].mxu0 %v913
        %v1857 = vpop.f32.mrb[0].mxu0
        %v1858 = vadd.f32 %v1761, %v1857
        %v1859 = vpop.f32.mrb[0].mxu0
        %v1860 = vpop.f32.mrb[0].mxu0
        %v1861 = vadd.f32 %v1764, %v1860
        %v1862 = vpop.f32.mrb[0].mxu0
        %1863 = vmatprep.mubr.bf16.mxu0 %v938
        %1864 = vmatmul.mubr.bf16.gmra.mrb[0].mxu0 %v914
        %v1865 = vpop.f32.mrb[0].mxu0
        %v1866 = vadd.f32 %v1769, %v1865
        %v1867 = vpop.f32.mrb[0].mxu0
        %v1868 = vpop.f32.mrb[0].mxu0
        %v1869 = vadd.f32 %v1772, %v1868
        %v1870 = vpop.f32.mrb[0].mxu0
        %1871 = vmatprep.mubr.bf16.mxu0 %v939
        %1872 = vmatmul.mubr.bf16.gmra.mrb[0].mxu0 %v915
        %v1873 = vpop.f32.mrb[0].mxu0
        %v1874 = vadd.f32 %v1777, %v1873
        %v1875 = vpop.f32.mrb[0].mxu0
        %v1876 = vpop.f32.mrb[0].mxu0
        %v1877 = vadd.f32 %v1780, %v1876
        %v1878 = vpop.f32.mrb[0].mxu0
        %1879 = vmatprep.mubr.bf16.mxu0 %v940
        %1880 = vmatmul.mubr.bf16.gmra.mrb[0].mxu0 %v916
        %v1881 = vpop.f32.mrb[0].mxu0
        %v1882 = vadd.f32 %v1785, %v1881
        %v1883 = vpop.f32.mrb[0].mxu0
        %v1884 = vpop.f32.mrb[0].mxu0
        %v1885 = vadd.f32 %v1788, %v1884
        %v1886 = vpop.f32.mrb[0].mxu0
        %1887 = vdwg.mxu0
        %1888 = vmatprep.subr.bf16.mxu0 0
        %1889 = vmatpush1.bf16.msra.mxu0 %v1501
        %1890 = vmatprep.subr.bf16.mxu0 0
        %1891 = vmatpush1.bf16.msra.mxu0 %v1502
        %1892 = vmatprep.subr.bf16.mxu0 0
        %1893 = vmatpush1.bf16.msra.mxu0 %v1503
        %1894 = vmatprep.subr.bf16.mxu0 0
        %1895 = vmatpush1.bf16.msra.mxu0 %v1504
        %1896 = vmatprep.subr.bf16.mxu0 0
        %1897 = vmatpush1.bf16.msra.mxu0 %v1505
        %1898 = vmatprep.subr.bf16.mxu0 0
        %1899 = vmatpush1.bf16.msra.mxu0 %v1506
        %1900 = vmatprep.subr.bf16.mxu0 0
        %1901 = vmatpush1.bf16.msra.mxu0 %v1507
        %1902 = vmatprep.subr.bf16.mxu0 0
        %1903 = vmatpush1.bf16.msra.mxu0 %v1508
        %1904 = vmatprep.subr.bf16.mxu0 0
        %1905 = vmatpush1.bf16.msra.mxu0 %v1509
        %1906 = vmatprep.subr.bf16.mxu0 0
        %1907 = vmatpush1.bf16.msra.mxu0 %v1510
        %1908 = vmatprep.subr.bf16.mxu0 0
        %1909 = vmatpush1.bf16.msra.mxu0 %v1511
        %1910 = vmatprep.subr.bf16.mxu0 0
        %1911 = vmatpush1.bf16.msra.mxu0 %v1512
        %1912 = vmatprep.subr.bf16.mxu0 0
        %1913 = vmatpush1.bf16.msra.mxu0 %v1513
        %1914 = vmatprep.subr.bf16.mxu0 0
        %1915 = vmatpush1.bf16.msra.mxu0 %v1514
        %1916 = vmatprep.subr.bf16.mxu0 0
        %1917 = vmatpush1.bf16.msra.mxu0 %v1515
        %1918 = vmatprep.subr.bf16.mxu0 0
        %1919 = vmatpush1.bf16.msra.mxu0 %v1516
        %1920 = vmatprep.mubr.bf16.mxu0 %v982
        %1921 = vmatmul.mubr.bf16.gmra.mrb[0].mxu0 %v958
        %v1922 = vpop.f32.mrb[0].mxu0
        %v1923 = vadd.f32 %v1826, %v1922
        %v1924 = vpop.f32.mrb[0].mxu0
        %v1925 = vpop.f32.mrb[0].mxu0
        %v1926 = vadd.f32 %v1829, %v1925
        %v1927 = vpop.f32.mrb[0].mxu0
        %1928 = vmatprep.mubr.bf16.mxu0 %v983
        %1929 = vmatmul.mubr.bf16.gmra.mrb[0].mxu0 %v959
        %v1930 = vpop.f32.mrb[0].mxu0
        %v1931 = vadd.f32 %v1834, %v1930
        %v1932 = vpop.f32.mrb[0].mxu0
        %v1933 = vpop.f32.mrb[0].mxu0
        %v1934 = vadd.f32 %v1837, %v1933
        %v1935 = vpop.f32.mrb[0].mxu0
        %1936 = vmatprep.mubr.bf16.mxu0 %v984
        %1937 = vmatmul.mubr.bf16.gmra.mrb[0].mxu0 %v960
        %v1938 = vpop.f32.mrb[0].mxu0
        %v1939 = vadd.f32 %v1842, %v1938
        %v1940 = vpop.f32.mrb[0].mxu0
        %v1941 = vpop.f32.mrb[0].mxu0
        %v1942 = vadd.f32 %v1845, %v1941
        %v1943 = vpop.f32.mrb[0].mxu0
        %1944 = vmatprep.mubr.bf16.mxu0 %v985
        %1945 = vmatmul.mubr.bf16.gmra.mrb[0].mxu0 %v961
        %v1946 = vpop.f32.mrb[0].mxu0
        %v1947 = vadd.f32 %v1850, %v1946
        %v1948 = vpop.f32.mrb[0].mxu0
        %v1949 = vpop.f32.mrb[0].mxu0
        %v1950 = vadd.f32 %v1853, %v1949
        %v1951 = vpop.f32.mrb[0].mxu0
        %1952 = vmatprep.mubr.bf16.mxu0 %v986
        %1953 = vmatmul.mubr.bf16.gmra.mrb[0].mxu0 %v962
        %v1954 = vpop.f32.mrb[0].mxu0
        %v1955 = vadd.f32 %v1858, %v1954
        %v1956 = vpop.f32.mrb[0].mxu0
        %v1957 = vpop.f32.mrb[0].mxu0
        %v1958 = vadd.f32 %v1861, %v1957
        %v1959 = vpop.f32.mrb[0].mxu0
        %1960 = vmatprep.mubr.bf16.mxu0 %v987
        %1961 = vmatmul.mubr.bf16.gmra.mrb[0].mxu0 %v963
        %v1962 = vpop.f32.mrb[0].mxu0
        %v1963 = vadd.f32 %v1866, %v1962
        %v1964 = vpop.f32.mrb[0].mxu0
        %v1965 = vpop.f32.mrb[0].mxu0
        %v1966 = vadd.f32 %v1869, %v1965
        %v1967 = vpop.f32.mrb[0].mxu0
        %1968 = vmatprep.mubr.bf16.mxu0 %v988
        %1969 = vmatmul.mubr.bf16.gmra.mrb[0].mxu0 %v964
        %v1970 = vpop.f32.mrb[0].mxu0
        %v1971 = vadd.f32 %v1874, %v1970
        %v1972 = vpop.f32.mrb[0].mxu0
        %v1973 = vpop.f32.mrb[0].mxu0
        %v1974 = vadd.f32 %v1877, %v1973
        %v1975 = vpop.f32.mrb[0].mxu0
        %1976 = vmatprep.mubr.bf16.mxu0 %v989
        %1977 = vmatmul.mubr.bf16.gmra.mrb[0].mxu0 %v965
        %v1978 = vpop.f32.mrb[0].mxu0
        %v1979 = vadd.f32 %v1882, %v1978
        %v1980 = vpop.f32.mrb[0].mxu0
        %v1981 = vpop.f32.mrb[0].mxu0
        %v1982 = vadd.f32 %v1885, %v1981
        %v1983 = vpop.f32.mrb[0].mxu0
        %1984 = vdwg.mxu0
        %1985 = vmatprep.subr.bf16.mxu0 0
        %1986 = vmatpush1.bf16.msra.mxu0 %v1517
        %1987 = vmatprep.subr.bf16.mxu0 0
        %1988 = vmatpush1.bf16.msra.mxu0 %v1518
        %1989 = vmatprep.subr.bf16.mxu0 0
        %1990 = vmatpush1.bf16.msra.mxu0 %v1519
        %1991 = vmatprep.subr.bf16.mxu0 0
        %1992 = vmatpush1.bf16.msra.mxu0 %v1520
        %1993 = vmatprep.subr.bf16.mxu0 0
        %1994 = vmatpush1.bf16.msra.mxu0 %v1521
        %1995 = vmatprep.subr.bf16.mxu0 0
        %1996 = vmatpush1.bf16.msra.mxu0 %v1522
        %1997 = vmatprep.subr.bf16.mxu0 0
        %1998 = vmatpush1.bf16.msra.mxu0 %v1523
        %1999 = vmatprep.subr.bf16.mxu0 0
        %2000 = vmatpush1.bf16.msra.mxu0 %v1524
        %2001 = vmatprep.subr.bf16.mxu0 0
        %2002 = vmatpush1.bf16.msra.mxu0 0
        %2003 = vmatprep.subr.bf16.mxu0 0
        %2004 = vmatpush1.bf16.msra.mxu0 0
        %2005 = vmatprep.subr.bf16.mxu0 0
        %2006 = vmatpush1.bf16.msra.mxu0 0
        %2007 = vmatprep.subr.bf16.mxu0 0
        %2008 = vmatpush1.bf16.msra.mxu0 0
        %2009 = vmatprep.subr.bf16.mxu0 0
        %2010 = vmatpush1.bf16.msra.mxu0 0
        %2011 = vmatprep.subr.bf16.mxu0 0
        %2012 = vmatpush1.bf16.msra.mxu0 0
        %2013 = vmatprep.subr.bf16.mxu0 0
        %2014 = vmatpush1.bf16.msra.mxu0 0
        %2015 = vmatprep.subr.bf16.mxu0 0
        %2016 = vmatpush1.bf16.msra.mxu0 0
        %2017 = vmatprep.mubr.bf16.mxu0 0
        %2018 = vmatmul.mubr.bf16.gmra.mrb[0].mxu0 %v1006
        %v2019 = vpop.f32.mrb[0].mxu0
        %v2020 = vadd.f32 %v1923, %v2019
        %v2021 = vpop.f32.mrb[0].mxu0
        %v2022 = vpop.f32.mrb[0].mxu0
        %v2023 = vadd.f32 %v1926, %v2022
        %v2024 = vpop.f32.mrb[0].mxu0
        %2025 = vmatprep.mubr.bf16.mxu0 0
        %2026 = vmatmul.mubr.bf16.gmra.mrb[0].mxu0 %v1007
        %v2027 = vpop.f32.mrb[0].mxu0
        %v2028 = vadd.f32 %v1931, %v2027
        %v2029 = vpop.f32.mrb[0].mxu0
        %v2030 = vpop.f32.mrb[0].mxu0
        %v2031 = vadd.f32 %v1934, %v2030
        %v2032 = vpop.f32.mrb[0].mxu0
        %2033 = vmatprep.mubr.bf16.mxu0 0
        %2034 = vmatmul.mubr.bf16.gmra.mrb[0].mxu0 %v1008
        %v2035 = vpop.f32.mrb[0].mxu0
        %v2036 = vadd.f32 %v1939, %v2035
        %v2037 = vpop.f32.mrb[0].mxu0
        %v2038 = vpop.f32.mrb[0].mxu0
        %v2039 = vadd.f32 %v1942, %v2038
        %v2040 = vpop.f32.mrb[0].mxu0
        %2041 = vmatprep.mubr.bf16.mxu0 0
        %2042 = vmatmul.mubr.bf16.gmra.mrb[0].mxu0 %v1009
        %v2043 = vpop.f32.mrb[0].mxu0
        %v2044 = vadd.f32 %v1947, %v2043
        %v2045 = vpop.f32.mrb[0].mxu0
        %v2046 = vpop.f32.mrb[0].mxu0
        %v2047 = vadd.f32 %v1950, %v2046
        %v2048 = vpop.f32.mrb[0].mxu0
        %2049 = vmatprep.mubr.bf16.mxu0 0
        %2050 = vmatmul.mubr.bf16.gmra.mrb[0].mxu0 %v1010
        %v2051 = vpop.f32.mrb[0].mxu0
        %v2052 = vadd.f32 %v1955, %v2051
        %v2053 = vpop.f32.mrb[0].mxu0
        %v2054 = vpop.f32.mrb[0].mxu0
        %v2055 = vadd.f32 %v1958, %v2054
        %v2056 = vpop.f32.mrb[0].mxu0
        %2057 = vmatprep.mubr.bf16.mxu0 0
        %2058 = vmatmul.mubr.bf16.gmra.mrb[0].mxu0 %v1011
        %v2059 = vpop.f32.mrb[0].mxu0
        %v2060 = vadd.f32 %v1963, %v2059
        %v2061 = vpop.f32.mrb[0].mxu0
        %v2062 = vpop.f32.mrb[0].mxu0
        %v2063 = vadd.f32 %v1966, %v2062
        %v2064 = vpop.f32.mrb[0].mxu0
        %2065 = vmatprep.mubr.bf16.mxu0 0
        %2066 = vmatmul.mubr.bf16.gmra.mrb[0].mxu0 %v1012
        %v2067 = vpop.f32.mrb[0].mxu0
        %v2068 = vadd.f32 %v1971, %v2067
        %v2069 = vpop.f32.mrb[0].mxu0
        %v2070 = vpop.f32.mrb[0].mxu0
        %v2071 = vadd.f32 %v1974, %v2070
        %v2072 = vpop.f32.mrb[0].mxu0
        %2073 = vmatprep.mubr.bf16.mxu0 0
        %2074 = vmatmul.mubr.bf16.gmra.mrb[0].mxu0 %v1013
        %v2075 = vpop.f32.mrb[0].mxu0
        %v2076 = vadd.f32 %v1979, %v2075
        %v2077 = vpop.f32.mrb[0].mxu0
        %v2078 = vpop.f32.mrb[0].mxu0
        %v2079 = vadd.f32 %v1982, %v2078
        %v2080 = vpop.f32.mrb[0].mxu0
        %2081 = vdwg.mxu0
        %v2082 = vmul.f32 %v2020, 0.5
        %v2083 = vmul.f32 %v2023, 0.5
        %v2084 = vmul.f32 %v2028, 0.5
        %v2085 = vmul.f32 %v2031, 0.5
        %v2086 = vmul.f32 %v2036, 0.5
        %v2087 = vmul.f32 %v2039, 0.5
        %v2088 = vmul.f32 %v2044, 0.5
        %v2089 = vmul.f32 %v2047, 0.5
        %v2090 = vmul.f32 %v2052, 0.5
        %v2091 = vmul.f32 %v2055, 0.5
        %v2092 = vmul.f32 %v2060, 0.5
        %v2093 = vmul.f32 %v2063, 0.5
        %v2094 = vmul.f32 %v2068, 0.5
        %v2095 = vmul.f32 %v2071, 0.5
        %v2096 = vmul.f32 %v2076, 0.5
        %v2097 = vmul.f32 %v2079, 0.5
        %v2098 = vmul.f32 %v2020, 0.70710677
        %v2099 = vmul.f32 %v2023, 0.70710677
        %v2100 = vmul.f32 %v2028, 0.70710677
        %v2101 = vmul.f32 %v2031, 0.70710677
        %v2102 = vmul.f32 %v2036, 0.70710677
        %v2103 = vmul.f32 %v2039, 0.70710677
        %v2104 = vmul.f32 %v2044, 0.70710677
        %v2105 = vmul.f32 %v2047, 0.70710677
        %v2106 = vmul.f32 %v2052, 0.70710677
        %v2107 = vmul.f32 %v2055, 0.70710677
        %v2108 = vmul.f32 %v2060, 0.70710677
        %v2109 = vmul.f32 %v2063, 0.70710677
        %v2110 = vmul.f32 %v2068, 0.70710677
        %v2111 = vmul.f32 %v2071, 0.70710677
        %v2112 = vmul.f32 %v2076, 0.70710677
        %v2113 = vmul.f32 %v2079, 0.70710677
        %v2114 = verf.f32.pop %v2098
        %v2115 = verf.f32.pop %v2099
        %v2116 = verf.f32.pop %v2100
        %v2117 = verf.f32.pop %v2101
        %v2118 = verf.f32.pop %v2102
        %v2119 = verf.f32.pop %v2103
        %v2120 = verf.f32.pop %v2104
        %v2121 = verf.f32.pop %v2105
        %v2122 = verf.f32.pop %v2106
        %v2123 = verf.f32.pop %v2107
        %v2124 = verf.f32.pop %v2108
        %v2125 = verf.f32.pop %v2109
        %v2126 = verf.f32.pop %v2110
        %v2127 = verf.f32.pop %v2111
        %v2128 = verf.f32.pop %v2112
        %v2129 = verf.f32.pop %v2113
        %v2130 = vadd.f32 %v2114, 1.0
        %v2131 = vadd.f32 %v2115, 1.0
        %v2132 = vadd.f32 %v2116, 1.0
        %v2133 = vadd.f32 %v2117, 1.0
        %v2134 = vadd.f32 %v2118, 1.0
        %v2135 = vadd.f32 %v2119, 1.0
        %v2136 = vadd.f32 %v2120, 1.0
        %v2137 = vadd.f32 %v2121, 1.0
        %v2138 = vadd.f32 %v2122, 1.0
        %v2139 = vadd.f32 %v2123, 1.0
        %v2140 = vadd.f32 %v2124, 1.0
        %v2141 = vadd.f32 %v2125, 1.0
        %v2142 = vadd.f32 %v2126, 1.0
        %v2143 = vadd.f32 %v2127, 1.0
        %v2144 = vadd.f32 %v2128, 1.0
        %v2145 = vadd.f32 %v2129, 1.0
        %v2146 = vmul.f32 %v2082, %v2130
        %v2147 = vmul.f32 %v2083, %v2131
        %v2148 = vmul.f32 %v2084, %v2132
        %v2149 = vmul.f32 %v2085, %v2133
        %v2150 = vmul.f32 %v2086, %v2134
        %v2151 = vmul.f32 %v2087, %v2135
        %v2152 = vmul.f32 %v2088, %v2136
        %v2153 = vmul.f32 %v2089, %v2137
        %v2154 = vmul.f32 %v2090, %v2138
        %v2155 = vmul.f32 %v2091, %v2139
        %v2156 = vmul.f32 %v2092, %v2140
        %v2157 = vmul.f32 %v2093, %v2141
        %v2158 = vmul.f32 %v2094, %v2142
        %v2159 = vmul.f32 %v2095, %v2143
        %v2160 = vmul.f32 %v2096, %v2144
        %v2161 = vmul.f32 %v2097, %v2145
        %v2162 = vadd.f32 %v2146, %v2147
        %v2163 = vadd.f32 %v2162, %v2148
        %v2164 = vadd.f32 %v2163, %v2149
        %v2165 = vadd.f32 %v2164, %v2150
        %v2166 = vadd.f32 %v2165, %v2151
        %v2167 = vadd.f32 %v2166, %v2152
        %v2168 = vadd.f32 %v2167, %v2153
        %v2169 = vrot.slane %v2168, 4
        %v2170 = vadd.f32 %v2168, %v2169
        %v2171 = vrot.slane %v2170, 2
        %v2172 = vadd.f32 %v2170, %v2171
        %v2173 = vrot.slane %v2172, 1
        %v2174 = vadd.f32 %v2172, %v2173
        %v2175 = vadd.f32 %v2154, %v2155
        %v2176 = vadd.f32 %v2175, %v2156
        %v2177 = vadd.f32 %v2176, %v2157
        %v2178 = vadd.f32 %v2177, %v2158
        %v2179 = vadd.f32 %v2178, %v2159
        %v2180 = vadd.f32 %v2179, %v2160
        %v2181 = vadd.f32 %v2180, %v2161
        %v2182 = vrot.slane %v2181, 4
        %v2183 = vadd.f32 %v2181, %v2182
        %v2184 = vrot.slane %v2183, 2
        %v2185 = vadd.f32 %v2183, %v2184
        %v2186 = vrot.slane %v2185, 1
        %v2187 = vadd.f32 %v2185, %v2186
        %v2188 = vrcp.pop 64.0
        %v2189 = vmul.f32 %v2174, %v2188
        %v2190 = vmul.f32 %v2187, %v2188
        %v2191 = vpack.c.bf16 %v2189, %v2189
        %v2192 = vpack.c.bf16 %v2190, %v2190
        %v2193 = vld [vmem:[%s5] sm:$0xf]
        %v2194 = vld [vmem:[%s5 + $0x4] sm:$0xf]
        %v2195 = vld [vmem:[%s5 + $0x8] sm:$0xf]
        %v2196 = vld [vmem:[%s5 + $0xc] sm:$0xf]
        %v2197 = vld [vmem:[%s5 + $0x10] sm:$0xf]
        %v2198 = vld [vmem:[%s5 + $0x14] sm:$0xf]
        %v2199 = vld [vmem:[%s5 + $0x18] sm:$0xf]
        %v2200 = vld [vmem:[%s5 + $0x1c] sm:$0xf]
        %v2201 = vld [vmem:[%s5 + $0x20] sm:$0xf]
        %v2202 = vld [vmem:[%s5 + $0x24] sm:$0xf]
        %v2203 = vld [vmem:[%s5 + $0x28] sm:$0xf]
        %v2204 = vld [vmem:[%s5 + $0x2c] sm:$0xf]
        %v2205 = vld [vmem:[%s5 + $0x30] sm:$0xf]
        %v2206 = vld [vmem:[%s5 + $0x34] sm:$0xf]
        %v2207 = vld [vmem:[%s5 + $0x38] sm:$0xf]
        %v2208 = vld [vmem:[%s5 + $0x3c] sm:$0xf]
        %v2209 = vld [vmem:[#allocation9] sm:$0x1]
        %v2211 = vlaneseq
        %v2212 = vshrl.u32 %v2211, 7
        %v2213 = vsub.s32 0, %v2212
        %v2214 = vrot.slane %v2209, %v2213
        %v2218 = vunpack.c.l.b16 %v2191
        %v2219 = vunpack.c.l.b16 %v2192
        %vm2220 = vcmask 1041409
        %v2221 = vsel %vm2220, %v2219, %v2218
        %v2222 = vpack.c.b16 %v2221, %v2221
        %v2240 = vunpack.c.l.b16 %v2193
        %v2241 = vunpack.c.l.b16 %v2194
        %v2242 = vunpack.c.l.b16 %v2195
        %v2243 = vunpack.c.l.b16 %v2196
        %v2244 = vunpack.c.l.b16 %v2197
        %v2245 = vunpack.c.l.b16 %v2198
        %v2246 = vunpack.c.l.b16 %v2199
        %v2247 = vunpack.c.l.b16 %v2200
        %v2248 = vunpack.c.l.b16 %v2201
        %v2249 = vunpack.c.l.b16 %v2202
        %v2250 = vunpack.c.l.b16 %v2203
        %v2251 = vunpack.c.l.b16 %v2204
        %v2252 = vunpack.c.l.b16 %v2205
        %v2253 = vunpack.c.l.b16 %v2206
        %v2254 = vunpack.c.l.b16 %v2207
        %v2255 = vunpack.c.l.b16 %v2208
        %v2256 = vpack.c.b16 %v2241, %v2240
        %v2257 = vpack.c.b16 %v2243, %v2242
        %v2258 = vpack.c.b16 %v2245, %v2244
        %v2259 = vpack.c.b16 %v2247, %v2246
        %v2260 = vpack.c.b16 %v2249, %v2248
        %v2261 = vpack.c.b16 %v2251, %v2250
        %v2262 = vpack.c.b16 %v2253, %v2252
        %v2263 = vpack.c.b16 %v2255, %v2254
        %2272 = vmatprep.subr.bf16.mxu0 0
        %2273 = vmatpush1.bf16.msra.mxu0 %v2256
        %2274 = vmatprep.subr.bf16.mxu0 0
        %2275 = vmatpush1.bf16.msra.mxu0 %v2257
        %2276 = vmatprep.subr.bf16.mxu0 0
        %2277 = vmatpush1.bf16.msra.mxu0 %v2258
        %2278 = vmatprep.subr.bf16.mxu0 0
        %2279 = vmatpush1.bf16.msra.mxu0 %v2259
        %2280 = vmatprep.subr.bf16.mxu0 0
        %2281 = vmatpush1.bf16.msra.mxu0 %v2260
        %2282 = vmatprep.subr.bf16.mxu0 0
        %2283 = vmatpush1.bf16.msra.mxu0 %v2261
        %2284 = vmatprep.subr.bf16.mxu0 0
        %2285 = vmatpush1.bf16.msra.mxu0 %v2262
        %2286 = vmatprep.subr.bf16.mxu0 0
        %2287 = vmatpush1.bf16.msra.mxu0 %v2263
        %2288 = vmatprep.subr.bf16.mxu0 0
        %2289 = vmatpush1.bf16.msra.mxu0 0
        %2290 = vmatprep.subr.bf16.mxu0 0
        %2291 = vmatpush1.bf16.msra.mxu0 0
        %2292 = vmatprep.subr.bf16.mxu0 0
        %2293 = vmatpush1.bf16.msra.mxu0 0
        %2294 = vmatprep.subr.bf16.mxu0 0
        %2295 = vmatpush1.bf16.msra.mxu0 0
        %2296 = vmatprep.subr.bf16.mxu0 0
        %2297 = vmatpush1.bf16.msra.mxu0 0
        %2298 = vmatprep.subr.bf16.mxu0 0
        %2299 = vmatpush1.bf16.msra.mxu0 0
        %2300 = vmatprep.subr.bf16.mxu0 0
        %2301 = vmatpush1.bf16.msra.mxu0 0
        %2302 = vmatprep.subr.bf16.mxu0 0
        %2303 = vmatpush1.bf16.msra.mxu0 0
        %2304 = vmatprep.mubr.bf16.mxu0 0
        %2305 = vmatmul.mubr.bf16.gmra.mrb[0].mxu0 %v2222
        %v2306 = vpop.f32.mrb[0].mxu0
        %v2307 = vadd.f32 %v2214, %v2306
        %v2308 = vpop.f32.mrb[0].mxu0
        %v2309 = vpop.f32.mrb[0].mxu0
        %v2310 = vpop.f32.mrb[0].mxu0
        %2311 = vdwg.mxu0
        %v2312 = vxor.u32 %v2307, 2147483648
        %v2313 = vmul.f32 %v2312, 1.442695
        %v2314 = vpow.pop %v2313
        %v2315 = vadd.f32 %v2314, 1.0
        %v2316 = vrcp.pop %v2315
        %v2317 = vmul.f32 1.0, %v2316
        %v2318 = vmul.f32 %v2307, %v2317
        %v2319 = vpack.c.bf16 %v2318, %v2318
        %v2320 = vld [vmem:[%s7] sm:$0xf]
        %v2321 = vld [vmem:[#allocation11] sm:$0x1]
        %v2323 = vlaneseq
        %v2324 = vshrl.u32 %v2323, 7
        %v2325 = vsub.s32 0, %v2324
        %v2326 = vrot.slane %v2321, %v2325
        %vm2328 = vcmask 64512
        %v2330 = vsel %vm2328, %v2319, 0
        %vm2332 = vcmask 1043456
        %v2334 = vsel %vm2332, %v2320, 0
        %2336 = vmatprep.subr.bf16.mxu0 0
        %2337 = vmatpush1.bf16.msra.mxu0 %v2334
        %2338 = vmatprep.subr.bf16.mxu0 0
        %2339 = vmatpush1.bf16.msra.mxu0 0
        %2340 = vmatprep.subr.bf16.mxu0 0
        %2341 = vmatpush1.bf16.msra.mxu0 0
        %2342 = vmatprep.subr.bf16.mxu0 0
        %2343 = vmatpush1.bf16.msra.mxu0 0
        %2344 = vmatprep.subr.bf16.mxu0 0
        %2345 = vmatpush1.bf16.msra.mxu0 0
        %2346 = vmatprep.subr.bf16.mxu0 0
        %2347 = vmatpush1.bf16.msra.mxu0 0
        %2348 = vmatprep.subr.bf16.mxu0 0
        %2349 = vmatpush1.bf16.msra.mxu0 0
        %2350 = vmatprep.subr.bf16.mxu0 0
        %2351 = vmatpush1.bf16.msra.mxu0 0
        %2352 = vmatprep.subr.bf16.mxu0 0
        %2353 = vmatpush1.bf16.msra.mxu0 0
        %2354 = vmatprep.subr.bf16.mxu0 0
        %2355 = vmatpush1.bf16.msra.mxu0 0
        %2356 = vmatprep.subr.bf16.mxu0 0
        %2357 = vmatpush1.bf16.msra.mxu0 0
        %2358 = vmatprep.subr.bf16.mxu0 0
        %2359 = vmatpush1.bf16.msra.mxu0 0
        %2360 = vmatprep.subr.bf16.mxu0 0
        %2361 = vmatpush1.bf16.msra.mxu0 0
        %2362 = vmatprep.subr.bf16.mxu0 0
        %2363 = vmatpush1.bf16.msra.mxu0 0
        %2364 = vmatprep.subr.bf16.mxu0 0
        %2365 = vmatpush1.bf16.msra.mxu0 0
        %2366 = vmatprep.subr.bf16.mxu0 0
        %2367 = vmatpush1.bf16.msra.mxu0 0
        %2368 = vmatprep.mubr.bf16.mxu0 0
        %2369 = vmatmul.mubr.bf16.gmra.mrb[0].mxu0 %v2330
        %v2370 = vpop.f32.mrb[0].mxu0
        %v2371 = vadd.f32 %v2326, %v2370
        %v2372 = vpop.f32.mrb[0].mxu0
        %v2373 = vpop.f32.mrb[0].mxu0
        %v2374 = vpop.f32.mrb[0].mxu0
        %2375 = vdwg.mxu0
        %v2376 = vxor.u32 %v2371, 2147483648
        %v2377 = vmul.f32 %v2376, 1.442695
        %v2378 = vpow.pop %v2377
        %v2379 = vadd.f32 %v2378, 1.0
        %v2380 = vrcp.pop %v2379
        %v2381 = vmul.f32 1.0, %v2380
        %v2384 = vunpack.c.l.s4 1966171168
        %v2385 = vunpack.c.0.s8 %v2384
        %v2386 = vlaneseq
        %v2387 = vshrl.u32 %v2386, 7
        %v2388 = vsub.s32 %v2385, %v2387
        %v2389 = vrot.slane %v2381, %v2388
        %v2390 = vcombine.high %v2389, %v2389
        %v2392 = vunpack.c.l.s4 1966171168
        %v2393 = vunpack.c.0.s8 %v2392
        %v2394 = vlaneseq
        %v2395 = vshrl.u32 %v2394, 7
        %v2396 = vsub.s32 %v2393, %v2395
        %v2397 = vrot.slane %v2389, %v2396
        %v2399 = vunpack.c.l.s4 1966171168
        %v2400 = vunpack.c.0.s8 %v2399
        %v2401 = vlaneseq
        %v2402 = vshrl.u32 %v2401, 7
        %v2403 = vsub.s32 %v2400, %v2402
        %v2404 = vrot.slane %v2390, %v2403
        %v2405 = vlaneseq
        %v2406 = vshrl.u32 %v2405, 7
        %v2407 = vsub.s32 0, %v2406
        %v2408 = vrot.slane %v2397, %v2407
        %v2409 = vlaneseq
        %v2410 = vshrl.u32 %v2409, 7
        %v2411 = vsub.s32 0, %v2410
        %v2412 = vrot.slane %v2404, %v2411
        %v2415 = vmul.f32 %v2146, %v2408
        %v2416 = vmul.f32 %v2147, %v2408
        %v2417 = vmul.f32 %v2148, %v2408
        %v2418 = vmul.f32 %v2149, %v2408
        %v2419 = vmul.f32 %v2150, %v2408
        %v2420 = vmul.f32 %v2151, %v2408
        %v2421 = vmul.f32 %v2152, %v2408
        %v2422 = vmul.f32 %v2153, %v2408
        %v2423 = vmul.f32 %v2154, %v2412
        %v2424 = vmul.f32 %v2155, %v2412
        %v2425 = vmul.f32 %v2156, %v2412
        %v2426 = vmul.f32 %v2157, %v2412
        %v2427 = vmul.f32 %v2158, %v2412
        %v2428 = vmul.f32 %v2159, %v2412
        %v2429 = vmul.f32 %v2160, %v2412
        %v2430 = vmul.f32 %v2161, %v2412
        %v2431 = vpack.c.bf16 %v2416, %v2415
        %v2432 = vpack.c.bf16 %v2418, %v2417
        %v2433 = vpack.c.bf16 %v2420, %v2419
        %v2434 = vpack.c.bf16 %v2422, %v2421
        %v2435 = vpack.c.bf16 %v2424, %v2423
        %v2436 = vpack.c.bf16 %v2426, %v2425
        %v2437 = vpack.c.bf16 %v2428, %v2427
        %v2438 = vpack.c.bf16 %v2430, %v2429
        %v2439 = vld [vmem:[%s9] sm:$0xf]
        %v2440 = vld [vmem:[%s9 + $0x4] sm:$0xf]
        %v2441 = vld [vmem:[%s9 + $0x8] sm:$0xf]
        %v2442 = vld [vmem:[%s9 + $0xc] sm:$0xf]
        %v2443 = vld [vmem:[%s9 + $0x10] sm:$0xf]
        %v2444 = vld [vmem:[%s9 + $0x14] sm:$0xf]
        %v2445 = vld [vmem:[%s9 + $0x18] sm:$0xf]
        %v2446 = vld [vmem:[%s9 + $0x1c] sm:$0xf]
        %v2447 = vld [vmem:[%s9 + $0x20] sm:$0xf]
        %v2448 = vld [vmem:[%s9 + $0x24] sm:$0xf]
        %v2449 = vld [vmem:[%s9 + $0x28] sm:$0xf]
        %v2450 = vld [vmem:[%s9 + $0x2c] sm:$0xf]
        %v2451 = vld [vmem:[%s9 + $0x30] sm:$0xf]
        %v2452 = vld [vmem:[%s9 + $0x34] sm:$0xf]
        %v2453 = vld [vmem:[%s9 + $0x38] sm:$0xf]
        %v2454 = vld [vmem:[%s9 + $0x3c] sm:$0xf]
        %v2455 = vld [vmem:[%s10] sm:$0x1]
        %v2457 = vlaneseq
        %v2458 = vshrl.u32 %v2457, 7
        %v2459 = vsub.s32 0, %v2458
        %v2460 = vrot.slane %v2455, %v2459
        %v2478 = vunpack.c.l.b16 %v2439
        %v2479 = vunpack.c.l.b16 %v2440
        %v2480 = vunpack.c.l.b16 %v2441
        %v2481 = vunpack.c.l.b16 %v2442
        %v2482 = vunpack.c.l.b16 %v2443
        %v2483 = vunpack.c.l.b16 %v2444
        %v2484 = vunpack.c.l.b16 %v2445
        %v2485 = vunpack.c.l.b16 %v2446
        %v2486 = vunpack.c.l.b16 %v2447
        %v2487 = vunpack.c.l.b16 %v2448
        %v2488 = vunpack.c.l.b16 %v2449
        %v2489 = vunpack.c.l.b16 %v2450
        %v2490 = vunpack.c.l.b16 %v2451
        %v2491 = vunpack.c.l.b16 %v2452
        %v2492 = vunpack.c.l.b16 %v2453
        %v2493 = vunpack.c.l.b16 %v2454
        %v2494 = vpack.c.b16 %v2479, %v2478
        %v2495 = vpack.c.b16 %v2481, %v2480
        %v2496 = vpack.c.b16 %v2483, %v2482
        %v2497 = vpack.c.b16 %v2485, %v2484
        %v2498 = vpack.c.b16 %v2487, %v2486
        %v2499 = vpack.c.b16 %v2489, %v2488
        %v2500 = vpack.c.b16 %v2491, %v2490
        %v2501 = vpack.c.b16 %v2493, %v2492
        %2510 = vmatprep.subr.bf16.mxu0 0
        %2511 = vmatpush1.bf16.msra.mxu0 %v2494
        %2512 = vmatprep.subr.bf16.mxu0 0
        %2513 = vmatpush1.bf16.msra.mxu0 %v2495
        %2514 = vmatprep.subr.bf16.mxu0 0
        %2515 = vmatpush1.bf16.msra.mxu0 %v2496
        %2516 = vmatprep.subr.bf16.mxu0 0
        %2517 = vmatpush1.bf16.msra.mxu0 %v2497
        %2518 = vmatprep.subr.bf16.mxu0 0
        %2519 = vmatpush1.bf16.msra.mxu0 %v2498
        %2520 = vmatprep.subr.bf16.mxu0 0
        %2521 = vmatpush1.bf16.msra.mxu0 %v2499
        %2522 = vmatprep.subr.bf16.mxu0 0
        %2523 = vmatpush1.bf16.msra.mxu0 %v2500
        %2524 = vmatprep.subr.bf16.mxu0 0
        %2525 = vmatpush1.bf16.msra.mxu0 %v2501
        %2526 = vmatprep.subr.bf16.mxu0 0
        %2527 = vmatpush1.bf16.msra.mxu0 0
        %2528 = vmatprep.subr.bf16.mxu0 0
        %2529 = vmatpush1.bf16.msra.mxu0 0
        %2530 = vmatprep.subr.bf16.mxu0 0
        %2531 = vmatpush1.bf16.msra.mxu0 0
        %2532 = vmatprep.subr.bf16.mxu0 0
        %2533 = vmatpush1.bf16.msra.mxu0 0
        %2534 = vmatprep.subr.bf16.mxu0 0
        %2535 = vmatpush1.bf16.msra.mxu0 0
        %2536 = vmatprep.subr.bf16.mxu0 0
        %2537 = vmatpush1.bf16.msra.mxu0 0
        %2538 = vmatprep.subr.bf16.mxu0 0
        %2539 = vmatpush1.bf16.msra.mxu0 0
        %2540 = vmatprep.subr.bf16.mxu0 0
        %2541 = vmatpush1.bf16.msra.mxu0 0
        %2542 = vmatprep.mubr.bf16.mxu0 0
        %2543 = vmatmul.mubr.bf16.gmra.mrb[0].mxu0 %v2431
        %v2544 = vpop.f32.mrb[0].mxu0
        %v2545 = vadd.f32 %v2460, %v2544
        %v2546 = vpop.f32.mrb[0].mxu0
        %v2547 = vpop.f32.mrb[0].mxu0
        %v2548 = vadd.f32 %v2460, %v2547
        %v2549 = vpop.f32.mrb[0].mxu0
        %2550 = vmatprep.mubr.bf16.mxu0 0
        %2551 = vmatmul.mubr.bf16.gmra.mrb[0].mxu0 %v2432
        %v2552 = vpop.f32.mrb[0].mxu0
        %v2553 = vadd.f32 %v2460, %v2552
        %v2554 = vpop.f32.mrb[0].mxu0
        %v2555 = vpop.f32.mrb[0].mxu0
        %v2556 = vadd.f32 %v2460, %v2555
        %v2557 = vpop.f32.mrb[0].mxu0
        %2558 = vmatprep.mubr.bf16.mxu0 0
        %2559 = vmatmul.mubr.bf16.gmra.mrb[0].mxu0 %v2433
        %v2560 = vpop.f32.mrb[0].mxu0
        %v2561 = vadd.f32 %v2460, %v2560
        %v2562 = vpop.f32.mrb[0].mxu0
        %v2563 = vpop.f32.mrb[0].mxu0
        %v2564 = vadd.f32 %v2460, %v2563
        %v2565 = vpop.f32.mrb[0].mxu0
        %2566 = vmatprep.mubr.bf16.mxu0 0
        %2567 = vmatmul.mubr.bf16.gmra.mrb[0].mxu0 %v2434
        %v2568 = vpop.f32.mrb[0].mxu0
        %v2569 = vadd.f32 %v2460, %v2568
        %v2570 = vpop.f32.mrb[0].mxu0
        %v2571 = vpop.f32.mrb[0].mxu0
        %v2572 = vadd.f32 %v2460, %v2571
        %v2573 = vpop.f32.mrb[0].mxu0
        %2574 = vmatprep.mubr.bf16.mxu0 0
        %2575 = vmatmul.mubr.bf16.gmra.mrb[0].mxu0 %v2435
        %v2576 = vpop.f32.mrb[0].mxu0
        %v2577 = vadd.f32 %v2460, %v2576
        %v2578 = vpop.f32.mrb[0].mxu0
        %v2579 = vpop.f32.mrb[0].mxu0
        %v2580 = vadd.f32 %v2460, %v2579
        %v2581 = vpop.f32.mrb[0].mxu0
        %2582 = vmatprep.mubr.bf16.mxu0 0
        %2583 = vmatmul.mubr.bf16.gmra.mrb[0].mxu0 %v2436
        %v2584 = vpop.f32.mrb[0].mxu0
        %v2585 = vadd.f32 %v2460, %v2584
        %v2586 = vpop.f32.mrb[0].mxu0
        %v2587 = vpop.f32.mrb[0].mxu0
        %v2588 = vadd.f32 %v2460, %v2587
        %v2589 = vpop.f32.mrb[0].mxu0
        %2590 = vmatprep.mubr.bf16.mxu0 0
        %2591 = vmatmul.mubr.bf16.gmra.mrb[0].mxu0 %v2437
        %v2592 = vpop.f32.mrb[0].mxu0
        %v2593 = vadd.f32 %v2460, %v2592
        %v2594 = vpop.f32.mrb[0].mxu0
        %v2595 = vpop.f32.mrb[0].mxu0
        %v2596 = vadd.f32 %v2460, %v2595
        %v2597 = vpop.f32.mrb[0].mxu0
        %2598 = vmatprep.mubr.bf16.mxu0 0
        %2599 = vmatmul.mubr.bf16.gmra.mrb[0].mxu0 %v2438
        %v2600 = vpop.f32.mrb[0].mxu0
        %v2601 = vadd.f32 %v2460, %v2600
        %v2602 = vpop.f32.mrb[0].mxu0
        %v2603 = vpop.f32.mrb[0].mxu0
        %v2604 = vadd.f32 %v2460, %v2603
        %v2605 = vpop.f32.mrb[0].mxu0
        %2606 = vdwg.mxu0
        %v2607 = vadd.f32 %v2545, %v581
        %v2608 = vadd.f32 %v2548, %v585
        %v2609 = vadd.f32 %v2553, %v591
        %v2610 = vadd.f32 %v2556, %v595
        %v2611 = vadd.f32 %v2561, %v601
        %v2612 = vadd.f32 %v2564, %v605
        %v2613 = vadd.f32 %v2569, %v611
        %v2614 = vadd.f32 %v2572, %v615
        %v2615 = vadd.f32 %v2577, %v621
        %v2616 = vadd.f32 %v2580, %v625
        %v2617 = vadd.f32 %v2585, %v631
        %v2618 = vadd.f32 %v2588, %v635
        %v2619 = vadd.f32 %v2593, %v641
        %v2620 = vadd.f32 %v2596, %v645
        %v2621 = vadd.f32 %v2601, %v651
        %v2622 = vadd.f32 %v2604, %v655
        %2623 = vst [vmem:[%s457] sm:$0xff] %v2607
        %2624 = vst [vmem:[%s457 + $0x8] sm:$0xff] %v2608
        %2625 = vst [vmem:[%s457 + $0x10] sm:$0xff] %v2609
        %2626 = vst [vmem:[%s457 + $0x18] sm:$0xff] %v2610
        %2627 = vst [vmem:[%s457 + $0x20] sm:$0xff] %v2611
        %2628 = vst [vmem:[%s457 + $0x28] sm:$0xff] %v2612
        %2629 = vst [vmem:[%s457 + $0x30] sm:$0xff] %v2613
        %2630 = vst [vmem:[%s457 + $0x38] sm:$0xff] %v2614
        %2631 = vst [vmem:[%s457 + $0x40] sm:$0xff] %v2615
        %2632 = vst [vmem:[%s457 + $0x48] sm:$0xff] %v2616
        %2633 = vst [vmem:[%s457 + $0x50] sm:$0xff] %v2617
        %2634 = vst [vmem:[%s457 + $0x58] sm:$0xff] %v2618
        %2635 = vst [vmem:[%s457 + $0x60] sm:$0xff] %v2619
        %2636 = vst [vmem:[%s457 + $0x68] sm:$0xff] %v2620
        %2637 = vst [vmem:[%s457 + $0x70] sm:$0xff] %v2621
        %2638 = vst [vmem:[%s457 + $0x78] sm:$0xff] %v2622
        %s2639 = sand.u32 %s274, 1
        %s2640 = scalar_lea.sflag [#allocation5], %s2639
        %s2641 = sand.u32 %s274, 1
        %s2642 = smul.addr %s2641, 128
        %s2643 = scalar_lea.vmem [#allocation12], %s2642
        // Predicated region
        $region85: #{tpu_custom_call.1} parent=63 // pred_check
          %p2644 = pneg %p284
        $region86: #{tpu_custom_call.1} parent=63 // pred_check_branch
          %2646 = sbr.rel (%p2644) target = $region88
        $region87: #{tpu_custom_call.1} parent=63 // pred_region
          %s2647 = smul.u32 2, %s30
          %s2649 = ssub.s32 2048, 2048
          %2650 = vsyncadd %s2640, %s2649
          %s2651 = smul.addr %s2647, 8
          %s2652 = smul.addr %s2651, 128
          %s2653 = scalar_lea.hbm %s11, %s2652
          %s2654 = sshll.u32 %s2643, 4
          %s2655 = int_to_ptr.vmem [resolvable:$true] %s2654
          %2660 = dma.vmem_to_hbm [thread:$0]  %s2655, 2048, %s2653, %s2640, 128, 128, 8
        $region88: #{tpu_custom_call.1} parent=63 // pred_fallthru
          _
      $region64: #{tpu_custom_call.1} parent=5 // pred_fallthru
        _
      %p2661 = scmp.le.s32.totalorder 2, %s25
      // Predicated region
      $region89: #{tpu_custom_call.1} parent=5 // pred_check
        %p2662 = pneg %p2661
      $region90: #{tpu_custom_call.1} parent=5 // pred_check_branch
        %2664 = sbr.rel (%p2662) target = $region92
      $region91: #{tpu_custom_call.1} parent=5 // pred_region
        %s2665 = ssub.s32 %s25, 2
        // Predicated region
        $region93: #{tpu_custom_call.1} parent=91 // pred_check
          %p2666 = pneg %p290
        $region94: #{tpu_custom_call.1} parent=91 // pred_check_branch
          %2668 = sbr.rel (%p2666) target = $region96
        $region95: #{tpu_custom_call.1} parent=91 // pred_region
          %s2669 = sand.u32 %s275, 1
          %s2670 = scalar_lea.sflag [#allocation5], %s2669
          %s2671 = sand.u32 %s275, 1
          %s2672 = smul.addr %s2671, 128
          %s2673 = scalar_lea.vmem [#allocation12], %s2672
          %2674 = dma.done %s2670, 2048
        $region96: #{tpu_custom_call.1} parent=91 // pred_fallthru
          _
      $region92: #{tpu_custom_call.1} parent=5 // pred_fallthru
        _
    $region6: #{tpu_custom_call.1} parent=1 // loop_footer
      %s29 = sadd.s32 1, %s25
    $region7: #{tpu_custom_call.1} parent=1 // loop_footer_branch
      %24 = sbr.rel target = $region3
    $region8: #{tpu_custom_call.1} parent=1 // loop_exit
      _
    %2675 = vsyncpa [#allocation4], 1
    %s2676 = scalar_lea.sflag [#allocation4], 1
    %2677 = vsyncpa %s2676, 1
    %2678 = vsyncpa [#allocation7], 1
    %2679 = vsyncpa [#allocation10], 1
    %2680 = vsyncpa [#allocation5], 1
    %s2681 = scalar_lea.sflag [#allocation5], 1
    %2682 = vsyncpa %s2681, 1

</llo_original>
